<compile_context>
chip_gen: v6e
topology: v6e:2x2x1
jax: 0.10.0
libtpu: 0.0.40
codegen_flags: <defaults>
</compile_context>

<pallas_src>
import functools

import jax
import jax.numpy as jnp
from jax.experimental import pallas as pl
from jax.experimental.pallas import tpu as pltpu

DTYPE = jnp.float32
WDTYPE = jnp.bfloat16
VMEM_LIMIT = 32 * 1024 * 1024


def _round_up(x, m):
    return (x + m - 1) // m * m


# =============================================================================
# Fused matmul kernel:  out = epilogue( prologue(A) @ W )
#   prologue (optional): relu(A * in_scale + in_bias)      (pre-activation BN)
#   epilogue:            r = acc * out_scale + out_bias ; act(r) ;
#                        r + res          (residual add)      or
#                        (1 + r) * res    (attention mask merge)
# =============================================================================

def _mm_kernel(*refs, has_pro, act, res_mode):
    a_ref, w_ref = refs[0], refs[1]
    i = 2
    if has_pro:
        is_ref, ib_ref = refs[i], refs[i + 1]
        i += 2
    os_ref, ob_ref = refs[i], refs[i + 1]
    i += 2
    if res_mode != "none":
        res_ref = refs[i]
        i += 1
    o_ref, acc_ref = refs[i], refs[i + 1]

    @pl.when(pl.program_id(2) == 0)
    def _():
        acc_ref[...] = jnp.zeros_like(acc_ref)

    a = a_ref[...]
    if has_pro:
        a = jnp.maximum(a.astype(jnp.float32) * is_ref[...] + ib_ref[...], 0.0)
        a = a.astype(WDTYPE)
    acc_ref[...] += jnp.dot(a, w_ref[...], preferred_element_type=jnp.float32)

    @pl.when(pl.program_id(2) == pl.num_programs(2) - 1)
    def _():
        r = acc_ref[...] * os_ref[...] + ob_ref[...]
        if act == "relu":
            r = jnp.maximum(r, 0.0)
        elif act == "sigmoid":
            r = 0.5 * (jnp.tanh(0.5 * r) + 1.0)     # stable sigmoid on the EUP
        if res_mode == "add":
            r = r + res_ref[...]
        elif res_mode == "mask_mul":
            r = (1.0 + r) * res_ref[...]
        o_ref[...] = r.astype(o_ref.dtype)


def matmul_fused(a, w, *, in_scale=None, in_bias=None, out_scale=None,
                 out_bias=None, act="none", res=None, res_mode="none"):
    """act((relu(a*in_s+in_b) if in_s else a) @ w * out_s + out_b) (+res)."""
    M, K = a.shape
    K2, N = w.shape
    assert K == K2
    has_pro = in_scale is not None
    if res is None:
        res_mode = "none"

    a = a.astype(WDTYPE)
    w = w.astype(WDTYPE)
    if out_scale is None:
        out_scale = jnp.ones((N,), DTYPE)
    if out_bias is None:
        out_bias = jnp.zeros((N,), DTYPE)

    # ---- tile selection (full-dim blocks where legal, no needless padding) ----
    Mp = _round_up(M, 8)
    tm = Mp if Mp <= 512 else 512
    Mp = _round_up(M, tm)

    if N < 128:
        tn, Np = N, N
    else:
        Np = _round_up(N, 128)
        tn = 256 if Np % 256 == 0 else 128

    if K <= 1024:
        tk, Kp = K, K
    else:
        Kp = _round_up(K, 128)
        tk = next(d for d in (512, 384, 256, 128) if Kp % d == 0)

    # ---- padding (cheap, fused by XLA inside the block-level jit) ----
    if (Mp, Kp) != (M, K):
        a = jnp.pad(a, ((0, Mp - M), (0, Kp - K)))
    if (Kp, Np) != (K, N):
        w = jnp.pad(w, ((0, Kp - K), (0, Np - N)))
    os_ = jnp.pad(out_scale.astype(DTYPE).reshape(1, N), ((0, 0), (0, Np - N)))
    ob_ = jnp.pad(out_bias.astype(DTYPE).reshape(1, N), ((0, 0), (0, Np - N)))

    inputs = [a, w]
    in_specs = [pl.BlockSpec((tm, tk), lambda i, j, k: (i, k)),
                pl.BlockSpec((tk, tn), lambda i, j, k: (k, j))]
    if has_pro:
        is_ = jnp.pad(in_scale.astype(DTYPE).reshape(1, K), ((0, 0), (0, Kp - K)))
        ib_ = jnp.pad(in_bias.astype(DTYPE).reshape(1, K), ((0, 0), (0, Kp - K)))
        inputs += [is_, ib_]
        in_specs += [pl.BlockSpec((1, tk), lambda i, j, k: (0, k)),
                     pl.BlockSpec((1, tk), lambda i, j, k: (0, k))]
    inputs += [os_, ob_]
    in_specs += [pl.BlockSpec((1, tn), lambda i, j, k: (0, j)),
                 pl.BlockSpec((1, tn), lambda i, j, k: (0, j))]
    if res_mode != "none":
        r = res.astype(DTYPE)
        if (Mp, Np) != (M, N):
            r = jnp.pad(r, ((0, Mp - M), (0, Np - N)))
        inputs.append(r)
        in_specs.append(pl.BlockSpec((tm, tn), lambda i, j, k: (i, j)))

    grid = (Mp // tm, Np // tn, Kp // tk)
    out = pl.pallas_call(
        functools.partial(_mm_kernel, has_pro=has_pro, act=act,
                          res_mode=res_mode),
        out_shape=jax.ShapeDtypeStruct((Mp, Np), DTYPE),
        grid_spec=pltpu.PrefetchScalarGridSpec(
            num_scalar_prefetch=0, grid=grid,
            in_specs=in_specs,
            out_specs=pl.BlockSpec((tm, tn), lambda i, j, k: (i, j)),
            scratch_shapes=[pltpu.VMEM((tm, tn), jnp.float32)]),
        compiler_params=pltpu.CompilerParams(
            dimension_semantics=("parallel", "parallel", "arbitrary"),
            vmem_limit_bytes=VMEM_LIMIT),
    )(*inputs)
    if (Mp, Np) != (M, N):
        out = out[:M, :N]
    return out


# =============================================================================
# Convolution = im2col (bf16, built inside the block jit) + fused matmul.
# =============================================================================

def conv2d(x, w_hwio, stride, padding, *, in_scale=None, in_bias=None,
           out_scale=None, out_bias=None, act="none", res=None,
           res_mode="none"):
    B, H, W, Cin = x.shape
    kh, kw, _, Cout = w_hwio.shape
    Ho = (H + 2 * padding - kh) // stride + 1
    Wo = (W + 2 * padding - kw) // stride + 1
    assert in_scale is None or (kh == 1 and kw == 1 and padding == 0), \
        "BN prologue fusion is only valid for unpadded 1x1 convolutions"
    xb = x.astype(WDTYPE)
    if kh == 1 and kw == 1 and padding == 0:
        patches = xb[:, ::stride, ::stride, :]
        K = Cin
    else:
        # TODO(synk): fold the kh*kw window taps into the matmul reduction grid
        # via manual DMA instead of materializing bf16 im2col patches in HBM.
        xp = jnp.pad(xb, ((0, 0), (padding, padding), (padding, padding), (0, 0)))
        cols = [xp[:, ki:ki + stride * (Ho - 1) + 1:stride,
                    kj:kj + stride * (Wo - 1) + 1:stride, :]
                for ki in range(kh) for kj in range(kw)]
        patches = jnp.concatenate(cols, axis=-1)
        K = kh * kw * Cin
    a = patches.reshape(B * Ho * Wo, K)
    wmat = w_hwio.reshape(K, Cout)
    r = None if res is None else res.reshape(B * Ho * Wo, Cout)
    out = matmul_fused(a, wmat, in_scale=in_scale, in_bias=in_bias,
                       out_scale=out_scale, out_bias=out_bias, act=act,
                       res=r, res_mode=res_mode if res is not None else "none")
    return out.reshape(B, Ho, Wo, Cout)


# =============================================================================
# MaxPool2d(3, stride=2, padding=1): single Pallas kernel, no window stacking.
# Inputs are three half-width shifted views (even cols, odd cols, odd cols
# shifted right with -inf); the kernel reduces the W taps elementwise and the
# H taps via a leading-dim even/odd split.
# =============================================================================

def _maxpool_kernel(e_ref, od_ref, op_ref, o_ref):
    m1 = jnp.maximum(jnp.maximum(e_ref[0], od_ref[0]), op_ref[0])  # (H, Wo, tc)
    h, wo, tc = m1.shape
    m1 = m1.reshape(h // 2, 2, wo, tc)
    eh = m1[:, 0]
    oh = m1[:, 1]
    neg = jnp.full((1, wo, tc), -jnp.inf, dtype=m1.dtype)
    oh_prev = jnp.concatenate([neg, oh[:-1]], axis=0)
    o_ref[0] = jnp.maximum(jnp.maximum(eh, oh), oh_prev)


@jax.jit
def max_pool_3x3_s2(x):
    """MaxPool2d(kernel=3, stride=2, padding=1), PyTorch semantics, even H/W."""
    B, H, W, C = x.shape
    assert H % 2 == 0 and W % 2 == 0
    Ho, Wo = H // 2, W // 2
    even = x[:, :, 0::2, :]
    odd = x[:, :, 1::2, :]
    neg = jnp.full((B, H, 1, C), -jnp.inf, x.dtype)
    odd_prev = jnp.concatenate([neg, odd[:, :, :-1, :]], axis=2)
    tc = C if C <= 128 else 128
    spec = pl.BlockSpec((1, H, Wo, tc), lambda b, c: (b, 0, 0, c))
    return pl.pallas_call(
        _maxpool_kernel,
        out_shape=jax.ShapeDtypeStruct((B, Ho, Wo, C), x.dtype),
        grid_spec=pltpu.PrefetchScalarGridSpec(
            num_scalar_prefetch=0, grid=(B, C // tc),
            in_specs=[spec, spec, spec],
            out_specs=pl.BlockSpec((1, Ho, Wo, tc), lambda b, c: (b, 0, 0, c)),
        ),
        compiler_params=pltpu.CompilerParams(
            dimension_semantics=("parallel", "parallel"),
            vmem_limit_bytes=VMEM_LIMIT),
    )(even, odd, odd_prev)


# =============================================================================
# Head: BatchNorm + ReLU + AvgPool2d(7) fused into one kernel, then the FC.
# =============================================================================

def _head_pool_kernel(x_ref, s_ref, b_ref, o_ref):
    r = jnp.maximum(x_ref[0] * s_ref[...] + b_ref[...], 0.0)   # (49, C)
    o_ref[...] = jnp.mean(r, axis=0, keepdims=True)


@jax.jit
def head(bn, fc_w, fc_b, x):
    B, H, W, C = x.shape
    assert H == 7 and W == 7, "AvgPool2d(7) requires a 7x7 map (224x224 input)"
    xr = x.reshape(B, H * W, C)
    pooled = pl.pallas_call(
        _head_pool_kernel,
        out_shape=jax.ShapeDtypeStruct((B, C), DTYPE),
        grid_spec=pltpu.PrefetchScalarGridSpec(
            num_scalar_prefetch=0, grid=(B,),
            in_specs=[pl.BlockSpec((1, H * W, C), lambda b: (b, 0, 0)),
                      pl.BlockSpec((1, C), lambda b: (0, 0)),
                      pl.BlockSpec((1, C), lambda b: (0, 0))],
            out_specs=pl.BlockSpec((1, C), lambda b: (b, 0)),
        ),
        compiler_params=pltpu.CompilerParams(
            dimension_semantics=("parallel",),
            vmem_limit_bytes=VMEM_LIMIT),
    )(xr, bn["scale"].reshape(1, C), bn["bias"].reshape(1, C))
    return matmul_fused(pooled, fc_w, out_bias=fc_b)


# =============================================================================
# Bilinear upsampling (align_corners=True) via two full-K matmuls (+ fused adds)
# =============================================================================

def _interp_matrix(out_size, in_size):
    i = jnp.arange(out_size, dtype=DTYPE)
    if out_size > 1:
        src = i * (in_size - 1) / (out_size - 1)
    else:
        src = jnp.zeros((out_size,), DTYPE)
    lo = jnp.clip(jnp.floor(src).astype(jnp.int32), 0, in_size - 1)
    hi = jnp.clip(lo + 1, 0, in_size - 1)
    w_hi = src - lo.astype(DTYPE)
    w_lo = 1.0 - w_hi
    return (w_lo[:, None] * jax.nn.one_hot(lo, in_size, dtype=DTYPE)
            + w_hi[:, None] * jax.nn.one_hot(hi, in_size, dtype=DTYPE))


@functools.partial(jax.jit, static_argnames=("out_h", "out_w"))
def upsample_add(x, adds, *, out_h, out_w):
    """nn.UpsamplingBilinear2d(size=(out_h,out_w)) plus fused elementwise adds."""
    B, H, W, C = x.shape
    wh = _interp_matrix(out_h, H)        # (out_h, H)
    ww = _interp_matrix(out_w, W)        # (out_w, W)
    t = jnp.transpose(x, (1, 0, 2, 3)).reshape(H, B * W * C)
    y = matmul_fused(wh, t)
    y = y.reshape(out_h, B, W, C).transpose(1, 0, 2, 3)        # (B,out_h,W,C)
    t2 = jnp.transpose(y, (2, 0, 1, 3)).reshape(W, B * out_h * C)
    y2 = matmul_fused(ww, t2)
    y2 = y2.reshape(out_w, B, out_h, C).transpose(1, 2, 0, 3)  # (B,out_h,out_w,C)
    for a in adds:
        y2 = y2 + a
    return y2


# =============================================================================
# Model blocks (jitted per block so shapes are cached and glue fuses)
# =============================================================================

@functools.partial(jax.jit, static_argnames=("stride",))
def _residual_block_jit(p, x, stride):
    bn1 = p["bn1"]
    # conv1 (1x1): prologue = relu(bn1(x)); epilogue = relu(bn2(.))
    out = conv2d(x, p["conv1"], 1, 0,
                 in_scale=bn1["scale"], in_bias=bn1["bias"],
                 out_scale=p["bn2"]["scale"], out_bias=p["bn2"]["bias"],
                 act="relu")
    # conv2 (3x3, stride): epilogue = relu(bn3(.))
    out = conv2d(out, p["conv2"], stride, 1,
                 out_scale=p["bn3"]["scale"], out_bias=p["bn3"]["bias"],
                 act="relu")
    if "conv4" in p:
        residual = conv2d(x, p["conv4"], stride, 0,
                          in_scale=bn1["scale"], in_bias=bn1["bias"])
    else:
        residual = x
    # conv3 (1x1) with residual add fused into the epilogue
    return conv2d(out, p["conv3"], 1, 0, res=residual, res_mode="add")


def residual_block(p, x):
    q = {k: v for k, v in p.items() if k != "stride"}
    return _residual_block_jit(q, x, stride=p["stride"])


@jax.jit
def mask_merge(pm, x, trunk):
    """Sequential(BN,ReLU,1x1,BN,ReLU,1x1,Sigmoid) then (1+mask)*trunk."""
    out = conv2d(x, pm["conv1"], 1, 0,
                 in_scale=pm["bn1"]["scale"], in_bias=pm["bn1"]["bias"],
                 out_scale=pm["bn2"]["scale"], out_bias=pm["bn2"]["bias"],
                 act="relu")
    return conv2d(out, pm["conv2"], 1, 0, act="sigmoid",
                  res=trunk, res_mode="mask_mul")


@jax.jit
def stem_conv(w, scale, bias, x):
    """Conv(7x7,s2,p3) + BN + ReLU (BN/ReLU fused into the matmul epilogue)."""
    return conv2d(x, w, 2, 3, out_scale=scale, out_bias=bias, act="relu")


# =============================================================================
# Parameter construction (deterministic synthetic init, eval-mode BatchNorm)
# =============================================================================

class KeyGen:
    def __init__(self, key):
        self.key = key
        self.i = 0

    def __call__(self):
        self.i += 1
        return jax.random.fold_in(self.key, self.i)


def make_conv(key, kh, kw, cin, cout):
    fan_in = kh * kw * cin
    std = (2.0 / fan_in) ** 0.5
    return (std * jax.random.normal(key, (kh, kw, cin, cout), DTYPE)).astype(WDTYPE)


def make_bn(key, c):
    k1, k2, k3, k4 = jax.random.split(key, 4)
    gamma = jax.random.uniform(k1, (c,), DTYPE, 0.5, 1.5)
    beta = 0.1 * jax.random.normal(k2, (c,), DTYPE)
    mean = 0.1 * jax.random.normal(k3, (c,), DTYPE)
    var = jax.random.uniform(k4, (c,), DTYPE, 0.5, 1.5)
    eps = 1e-5
    scale = gamma / jnp.sqrt(var + eps)
    bias = beta - mean * scale
    return {"scale": scale, "bias": bias}


def make_residual_block(kg, cin, cout, stride=1):
    p = {
        "bn1": make_bn(kg(), cin),
        "conv1": make_conv(kg(), 1, 1, cin, cout // 4),
        "bn2": make_bn(kg(), cout // 4),
        "conv2": make_conv(kg(), 3, 3, cout // 4, cout // 4),
        "bn3": make_bn(kg(), cout // 4),
        "conv3": make_conv(kg(), 1, 1, cout // 4, cout),
        "stride": stride,
    }
    if cin != cout or stride != 1:
        p["conv4"] = make_conv(kg(), 1, 1, cin, cout)
    return p


def make_mask_head(kg, c):
    return {"bn1": make_bn(kg(), c), "conv1": make_conv(kg(), 1, 1, c, c),
            "bn2": make_bn(kg(), c), "conv2": make_conv(kg(), 1, 1, c, c)}


# ---------------------------- attention modules ------------------------------

def make_attention_stage1(kg, c):
    return {
        "first": make_residual_block(kg, c, c),
        "trunk": [make_residual_block(kg, c, c) for _ in range(2)],
        "softmax1": make_residual_block(kg, c, c),
        "skip1": make_residual_block(kg, c, c),
        "softmax2": make_residual_block(kg, c, c),
        "skip2": make_residual_block(kg, c, c),
        "softmax3": [make_residual_block(kg, c, c) for _ in range(2)],
        "softmax4": make_residual_block(kg, c, c),
        "softmax5": make_residual_block(kg, c, c),
        "mask": make_mask_head(kg, c),
        "last": make_residual_block(kg, c, c),
    }


def attention_stage1(p, x):
    x = residual_block(p["first"], x)
    out_trunk = x
    for rb in p["trunk"]:
        out_trunk = residual_block(rb, out_trunk)
    out_mpool1 = max_pool_3x3_s2(x)
    out_softmax1 = residual_block(p["softmax1"], out_mpool1)
    out_skip1 = residual_block(p["skip1"], out_softmax1)
    out_mpool2 = max_pool_3x3_s2(out_softmax1)
    out_softmax2 = residual_block(p["softmax2"], out_mpool2)
    out_skip2 = residual_block(p["skip2"], out_softmax2)
    out_mpool3 = max_pool_3x3_s2(out_softmax2)
    out_softmax3 = out_mpool3
    for rb in p["softmax3"]:
        out_softmax3 = residual_block(rb, out_softmax3)
    out = upsample_add(out_softmax3, (out_softmax2, out_skip2),
                       out_h=out_softmax2.shape[1], out_w=out_softmax2.shape[2])
    out_softmax4 = residual_block(p["softmax4"], out)
    out = upsample_add(out_softmax4, (out_softmax1, out_skip1),
                       out_h=out_softmax1.shape[1], out_w=out_softmax1.shape[2])
    out_softmax5 = residual_block(p["softmax5"], out)
    out_interp1 = upsample_add(out_softmax5, (out_trunk,),
                               out_h=out_trunk.shape[1], out_w=out_trunk.shape[2])
    out = mask_merge(p["mask"], out_interp1, out_trunk)
    return residual_block(p["last"], out)


def make_attention_stage2(kg, c):
    return {
        "first": make_residual_block(kg, c, c),
        "trunk": [make_residual_block(kg, c, c) for _ in range(2)],
        "softmax1": make_residual_block(kg, c, c),
        "skip1": make_residual_block(kg, c, c),
        "softmax2": [make_residual_block(kg, c, c) for _ in range(2)],
        "softmax3": make_residual_block(kg, c, c),
        "mask": make_mask_head(kg, c),
        "last": make_residual_block(kg, c, c),
    }


def attention_stage2(p, x):
    x = residual_block(p["first"], x)
    out_trunk = x
    for rb in p["trunk"]:
        out_trunk = residual_block(rb, out_trunk)
    out_mpool1 = max_pool_3x3_s2(x)
    out_softmax1 = residual_block(p["softmax1"], out_mpool1)
    out_skip1 = residual_block(p["skip1"], out_softmax1)
    out_mpool2 = max_pool_3x3_s2(out_softmax1)
    out_softmax2 = out_mpool2
    for rb in p["softmax2"]:
        out_softmax2 = residual_block(rb, out_softmax2)
    out = upsample_add(out_softmax2, (out_softmax1, out_skip1),
                       out_h=out_softmax1.shape[1], out_w=out_softmax1.shape[2])
    out_softmax3 = residual_block(p["softmax3"], out)
    out_interp1 = upsample_add(out_softmax3, (out_trunk,),
                               out_h=out_trunk.shape[1], out_w=out_trunk.shape[2])
    out = mask_merge(p["mask"], out_interp1, out_trunk)
    return residual_block(p["last"], out)


def make_attention_stage3(kg, c):
    return {
        "first": make_residual_block(kg, c, c),
        "trunk": [make_residual_block(kg, c, c) for _ in range(2)],
        "softmax1": [make_residual_block(kg, c, c) for _ in range(2)],
        "mask": make_mask_head(kg, c),
        "last": make_residual_block(kg, c, c),
    }


def attention_stage3(p, x):
    x = residual_block(p["first"], x)
    out_trunk = x
    for rb in p["trunk"]:
        out_trunk = residual_block(rb, out_trunk)
    out_mpool1 = max_pool_3x3_s2(x)
    out_softmax1 = out_mpool1
    for rb in p["softmax1"]:
        out_softmax1 = residual_block(rb, out_softmax1)
    out_interp1 = upsample_add(out_softmax1, (out_trunk,),
                               out_h=out_trunk.shape[1], out_w=out_trunk.shape[2])
    out = mask_merge(p["mask"], out_interp1, out_trunk)
    return residual_block(p["last"], out)


# ---------------------------- full model -------------------------------------

def make_model_params(key):
    kg = KeyGen(key)
    p = {}
    p["conv1"] = make_conv(kg(), 7, 7, 3, 64)
    p["bn1"] = make_bn(kg(), 64)
    p["rb1"] = make_residual_block(kg, 64, 256)
    p["att1"] = make_attention_stage1(kg, 256)
    p["rb2"] = make_residual_block(kg, 256, 512, 2)
    p["att2"] = make_attention_stage2(kg, 512)
    p["att2_2"] = make_attention_stage2(kg, 512)
    p["rb3"] = make_residual_block(kg, 512, 1024, 2)
    p["att3"] = make_attention_stage3(kg, 1024)
    p["att3_2"] = make_attention_stage3(kg, 1024)
    p["att3_3"] = make_attention_stage3(kg, 1024)
    p["rb4"] = make_residual_block(kg, 1024, 2048, 2)
    p["rb5"] = make_residual_block(kg, 2048, 2048)
    p["rb6"] = make_residual_block(kg, 2048, 2048)
    p["bn2"] = make_bn(kg(), 2048)
    p["fc_w"] = 0.01 * jax.random.normal(kg(), (2048, 10), DTYPE)
    p["fc_b"] = jnp.zeros((10,), DTYPE)
    return p


def forward(p, x_nchw):
    # PyTorch-style NCHW input -> internal NHWC
    x = jnp.transpose(x_nchw, (0, 2, 3, 1)).astype(DTYPE)
    out = stem_conv(p["conv1"], p["bn1"]["scale"], p["bn1"]["bias"], x)
    out = max_pool_3x3_s2(out)
    out = residual_block(p["rb1"], out)
    out = attention_stage1(p["att1"], out)
    out = residual_block(p["rb2"], out)
    out = attention_stage2(p["att2"], out)
    out = attention_stage2(p["att2_2"], out)
    out = residual_block(p["rb3"], out)
    out = attention_stage3(p["att3"], out)
    out = attention_stage3(p["att3_2"], out)
    out = attention_stage3(p["att3_3"], out)
    out = residual_block(p["rb4"], out)
    out = residual_block(p["rb5"], out)
    out = residual_block(p["rb6"], out)
    # mpool2 = BN + ReLU + AvgPool2d(7), fused, then fc
    out = head(p["bn2"], p["fc_w"], p["fc_b"], out)
    return out


if __name__ == "__main__":
    key = jax.random.PRNGKey(0)
    params = make_model_params(jax.random.fold_in(key, 1))
    # The architecture hard-codes AvgPool2d(7) and the 56/28/14 upsample sizes,
    # so the forward pass implies a 224x224x3 input; batch kept at 1.
    x = jax.random.normal(jax.random.fold_in(key, 2), (1, 3, 224, 224), DTYPE)
    logits = forward(params, x)
    logits = jax.block_until_ready(logits)
    assert logits.shape == (1, 10)
    assert bool(jnp.all(jnp.isfinite(logits)))
    print("KERNEL_OK")
</pallas_src>

<mosaic_0001>
module attributes {stable_mosaic.version = 11 : i64} {
  func.func @_mm_kernel(%arg0: i32, %arg1: i32, %arg2: i32, %arg3: memref<512x147xbf16, #tpu.memory_space<vmem>>, %arg4: memref<147x64xbf16, #tpu.memory_space<vmem>>, %arg5: memref<1x64xf32, #tpu.memory_space<vmem>>, %arg6: memref<1x64xf32, #tpu.memory_space<vmem>>, %arg7: memref<512x64xf32, #tpu.memory_space<vmem>>, %arg8: memref<512x64xf32, #tpu.memory_space<vmem>>) attributes {dimension_semantics = [#tpu.dimension_semantics<parallel>, #tpu.dimension_semantics<parallel>, #tpu.dimension_semantics<arbitrary>], iteration_bounds = array<i64: 25, 1, 1>, scalar_prefetch = 0 : i64, scratch_operands = 1 : i64, tpu.core_type = #tpu.core_type<tc>, window_params = [{transform_indices = @transform_0, window_bounds = array<i64: 512, 147>}, {transform_indices = @transform_1, window_bounds = array<i64: 147, 64>}, {transform_indices = @transform_2, window_bounds = array<i64: 1, 64>}, {transform_indices = @transform_3, window_bounds = array<i64: 1, 64>}, {transform_indices = @transform_4, window_bounds = array<i64: 512, 64>}]} {
    %c0_i32 = arith.constant 0 : i32
    %0 = arith.cmpi eq, %arg2, %c0_i32 : i32
    %1 = arith.extui %0 : i1 to i32
    %c0_i32_0 = arith.constant 0 : i32
    %2 = arith.cmpi ne, %1, %c0_i32_0 : i32
    scf.if %2 {
      %cst_10 = arith.constant 0.000000e+00 : f32
      %12 = vector.broadcast %cst_10 : f32 to vector<512x64xf32>
      %c0_11 = arith.constant 0 : index
      %c0_12 = arith.constant 0 : index
      %13 = vector.load %arg8[%c0_11, %c0_12] : memref<512x64xf32, #tpu.memory_space<vmem>>, vector<512x64xf32>
      tpu.vector_store %arg8[%c0_11, %c0_12], %12 {strides = array<i32>} : memref<512x64xf32, #tpu.memory_space<vmem>>, vector<512x64xf32>,
    } else {
    }
    %c0 = arith.constant 0 : index
    %c0_1 = arith.constant 0 : index
    %3 = vector.load %arg3[%c0, %c0_1] : memref<512x147xbf16, #tpu.memory_space<vmem>>, vector<512x147xbf16>
    %c0_2 = arith.constant 0 : index
    %c0_3 = arith.constant 0 : index
    %4 = vector.load %arg8[%c0_2, %c0_3] : memref<512x64xf32, #tpu.memory_space<vmem>>, vector<512x64xf32>
    %c0_4 = arith.constant 0 : index
    %c0_5 = arith.constant 0 : index
    %5 = vector.load %arg4[%c0_4, %c0_5] : memref<147x64xbf16, #tpu.memory_space<vmem>>, vector<147x64xbf16>
    %cst = arith.constant dense<0.000000e+00> : vector<512x64xf32>
    %6 = tpu.matmul %3, %5, %cst {dimension_numbers = #tpu.dot_dimension_numbers<[1], [0], [0], [1], [0, 0, 1, 1], [], []>} : vector<512x147xbf16>, vector<147x64xbf16>, vector<512x64xf32> -> vector<512x64xf32>
    %7 = arith.addf %4, %6 : vector<512x64xf32>
    %c0_6 = arith.constant 0 : index
    %c0_7 = arith.constant 0 : index
    %8 = vector.load %arg8[%c0_6, %c0_7] : memref<512x64xf32, #tpu.memory_space<vmem>>, vector<512x64xf32>
    tpu.vector_store %arg8[%c0_6, %c0_7], %7 {strides = array<i32>} : memref<512x64xf32, #tpu.memory_space<vmem>>, vector<512x64xf32>,
    %c0_i32_8 = arith.constant 0 : i32
    %9 = arith.cmpi eq, %arg2, %c0_i32_8 : i32
    %10 = arith.extui %9 : i1 to i32
    %c0_i32_9 = arith.constant 0 : i32
    %11 = arith.cmpi ne, %10, %c0_i32_9 : i32
    scf.if %11 {
      %c0_10 = arith.constant 0 : index
      %c0_11 = arith.constant 0 : index
      %12 = vector.load %arg8[%c0_10, %c0_11] : memref<512x64xf32, #tpu.memory_space<vmem>>, vector<512x64xf32>
      %c0_12 = arith.constant 0 : index
      %c0_13 = arith.constant 0 : index
      %13 = vector.load %arg5[%c0_12, %c0_13] : memref<1x64xf32, #tpu.memory_space<vmem>>, vector<1x64xf32>
      %14 = vector.broadcast %13 : vector<1x64xf32> to vector<512x64xf32>
      %15 = arith.mulf %12, %14 : vector<512x64xf32>
      %c0_14 = arith.constant 0 : index
      %c0_15 = arith.constant 0 : index
      %16 = vector.load %arg6[%c0_14, %c0_15] : memref<1x64xf32, #tpu.memory_space<vmem>>, vector<1x64xf32>
      %17 = vector.broadcast %16 : vector<1x64xf32> to vector<512x64xf32>
      %18 = arith.addf %15, %17 : vector<512x64xf32>
      %cst_16 = arith.constant 0.000000e+00 : f32
      %19 = vector.broadcast %cst_16 : f32 to vector<512x64xf32>
      %20 = arith.maximumf %18, %19 : vector<512x64xf32>
      %c0_17 = arith.constant 0 : index
      %c0_18 = arith.constant 0 : index
      %21 = vector.load %arg7[%c0_17, %c0_18] : memref<512x64xf32, #tpu.memory_space<vmem>>, vector<512x64xf32>
      tpu.vector_store %arg7[%c0_17, %c0_18], %20 {strides = array<i32>} : memref<512x64xf32, #tpu.memory_space<vmem>>, vector<512x64xf32>,
    } else {
    }
    return
  }
  func.func @transform_0(%arg0: i32, %arg1: i32, %arg2: i32) -> (i32, i32) {
    %c0_i32 = arith.constant 0 : i32
    return %arg0, %arg2 : i32, i32
  }
  func.func @transform_1(%arg0: i32, %arg1: i32, %arg2: i32) -> (i32, i32) {
    %c0_i32 = arith.constant 0 : i32
    return %arg2, %arg1 : i32, i32
  }
  func.func @transform_2(%arg0: i32, %arg1: i32, %arg2: i32) -> (i32, i32) {
    %c0_i32 = arith.constant 0 : i32
    %c0_i32_0 = arith.constant 0 : i32
    return %c0_i32, %arg1 : i32, i32
  }
  func.func @transform_3(%arg0: i32, %arg1: i32, %arg2: i32) -> (i32, i32) {
    %c0_i32 = arith.constant 0 : i32
    %c0_i32_0 = arith.constant 0 : i32
    return %c0_i32, %arg1 : i32, i32
  }
  func.func @transform_4(%arg0: i32, %arg1: i32, %arg2: i32) -> (i32, i32) {
    %c0_i32 = arith.constant 0 : i32
    return %arg0, %arg1 : i32, i32
  }
}

</mosaic_0001>

<llo_original>
// kernel: stem_conv.1
$region0: #{stem_conv.1}
  #allocation0 [shape = 'u32[]', space=smem, size = 0x4, offset = 0x4, fixed_abs, tag = 'smem constant byte address 0x4 - core index']
  #allocation1 [shape = 'u32[144,128]{1,0:T(1,128)}', space=vmem, size = 0x12000, scoped, tag = 'internal scratch']
  #allocation2 [shape = 'f32[512,64]{1,0:T(8,128)}', space=vmem, size = 0x40000, scoped, tag = 'scratch operand']
  %s0 = inlined_call_operand.vmem [shape: bf16[12800,147], index: 0, kind: input, shape index: {}]
  %s1 = inlined_call_operand.vmem [shape: bf16[147,64], index: 1, kind: input, shape index: {}]
  %s2 = inlined_call_operand.vmem [shape: f32[1,64], index: 2, kind: input, shape index: {}]
  %s3 = inlined_call_operand.vmem [shape: f32[1,64], index: 3, kind: input, shape index: {}]
  %s4 = inlined_call_operand.vmem [shape: f32[12800,64], index: 4, kind: output, shape index: {}]
  %s5 = sld [smem:[#allocation0]]
  $region57: #{stem_conv.1} parent=0
    _
  %s7 = ssub.s32 1, %s5
  %s8 = scalar_select 0, %s7, %s5
  loop: start=0, step=1, limit=27
  $region2: #{stem_conv.1} parent=0 // loop_pre_header
    _
  $region3: #{stem_conv.1} parent=0 // loop_header
    %s10 = sphi 0, %s14
    %p11 = scmp.ge.s32.totalorder %s10, 27
    %s17 = sphi 0, %s36
    %s18 = sphi 0, %s32
    %s19 = sphi 0, %s28
    %s20 = sphi 0, %s17
    %s21 = sphi 0, %s18
    %s22 = sphi 0, %s19
    %s23 = sphi 0, %s20
    %s24 = sphi 0, %s21
    %s25 = sphi 0, %s22
    %s41 = sphi 0, %s43
    %s44 = sphi 0, %s41
    %s45 = sphi 0, %s44
    %s61 = sphi 0, %s45
    %s69 = sphi 0, %s71
    %s72 = sphi 0, %s69
    %s73 = sphi 0, %s72
    %s89 = sphi 0, %s73
    %s95 = sphi 0, %s97
    %s98 = sphi 0, %s95
    %s99 = sphi 0, %s98
    %s115 = sphi 0, %s99
    %s121 = sphi 0, %s123
    %s124 = sphi 0, %s121
    %s125 = sphi 0, %s124
    %s141 = sphi 0, %s125
    %s149 = sphi 0, %s151
    %s152 = sphi 0, %s149
    %s153 = sphi 0, %s152
    %s169 = sphi 0, %s153
  $region4: #{stem_conv.1} parent=0 // loop_header_branch
    %13 = sbr.rel (%p11) target = $region8
  $region5: #{stem_conv.1} parent=0 // loop_body
    %s15 = ssub.s32 %s10, 1
    %s16 = ssub.s32 %s10, 2
    %s26 = sadd.s32 1, %s19
    %p27 = scmp.ge.s32.totalorder %s26, 1
    %s28 = scalar_select %p27, 0, %s26
    %s29 = sadd.s32 1, %s18
    %s30 = scalar_select %p27, %s29, %s18
    %p31 = scmp.ge.s32.totalorder %s30, 1
    %s32 = scalar_select %p31, 0, %s30
    %s33 = sadd.s32 1, %s17
    %s34 = scalar_select %p31, %s33, %s17
    %p35 = scmp.ge.s32.totalorder %s34, 25
    %s36 = scalar_select %p35, 0, %s34
    %s37 = ssub.s32 %s17, %s36
    %s38 = ssub.s32 %s19, %s28
    %s39 = sor.u32 %s37, %s38
    %p40 = scmp.eq.s32.totalorder %s39, 0
    %s42 = sadd.s32 %s41, 1
    %s43 = scalar_select %p40, %s41, %s42
    %p46 = pneg %p40
    %p47 = scmp.eq.s32.totalorder %s10, 24
    %p48 = por %p46, %p47
    %p49 = scmp.ne.s32.totalorder %s41, %s44
    %p50 = scmp.eq.s32.totalorder %s10, 0
    %p51 = por %p49, %p50
    %p52 = scmp.ne.s32.totalorder %s41, %s44
    %p53 = scmp.eq.s32.totalorder %s15, 24
    %p54 = por %p52, %p53
    %p55 = scmp.ne.s32.totalorder %s44, %s45
    %p56 = scmp.eq.s32.totalorder %s15, 0
    %p57 = por %p55, %p56
    %p58 = scmp.ne.s32.totalorder %s44, %s45
    %p59 = scmp.eq.s32.totalorder %s16, 24
    %p60 = por %p58, %p59
    %p62 = scmp.ne.s32.totalorder %s45, %s61
    %p63 = scmp.eq.s32.totalorder %s16, 0
    %p64 = por %p62, %p63
    %s65 = ssub.s32 %s19, %s28
    %s66 = ssub.s32 %s18, %s32
    %s67 = sor.u32 %s65, %s66
    %p68 = scmp.eq.s32.totalorder %s67, 0
    %s70 = sadd.s32 %s69, 1
    %s71 = scalar_select %p68, %s69, %s70
    %p74 = pneg %p68
    %p75 = scmp.eq.s32.totalorder %s10, 24
    %p76 = por %p74, %p75
    %p77 = scmp.ne.s32.totalorder %s69, %s72
    %p78 = scmp.eq.s32.totalorder %s10, 0
    %p79 = por %p77, %p78
    %p80 = scmp.ne.s32.totalorder %s69, %s72
    %p81 = scmp.eq.s32.totalorder %s15, 24
    %p82 = por %p80, %p81
    %p83 = scmp.ne.s32.totalorder %s72, %s73
    %p84 = scmp.eq.s32.totalorder %s15, 0
    %p85 = por %p83, %p84
    %p86 = scmp.ne.s32.totalorder %s72, %s73
    %p87 = scmp.eq.s32.totalorder %s16, 24
    %p88 = por %p86, %p87
    %p90 = scmp.ne.s32.totalorder %s73, %s89
    %p91 = scmp.eq.s32.totalorder %s16, 0
    %p92 = por %p90, %p91
    %s93 = ssub.s32 %s18, %s32
    %p94 = scmp.eq.s32.totalorder %s93, 0
    %s96 = sadd.s32 %s95, 1
    %s97 = scalar_select %p94, %s95, %s96
    %p100 = pneg %p94
    %p101 = scmp.eq.s32.totalorder %s10, 24
    %p102 = por %p100, %p101
    %p103 = scmp.ne.s32.totalorder %s95, %s98
    %p104 = scmp.eq.s32.totalorder %s10, 0
    %p105 = por %p103, %p104
    %p106 = scmp.ne.s32.totalorder %s95, %s98
    %p107 = scmp.eq.s32.totalorder %s15, 24
    %p108 = por %p106, %p107
    %p109 = scmp.ne.s32.totalorder %s98, %s99
    %p110 = scmp.eq.s32.totalorder %s15, 0
    %p111 = por %p109, %p110
    %p112 = scmp.ne.s32.totalorder %s98, %s99
    %p113 = scmp.eq.s32.totalorder %s16, 24
    %p114 = por %p112, %p113
    %p116 = scmp.ne.s32.totalorder %s99, %s115
    %p117 = scmp.eq.s32.totalorder %s16, 0
    %p118 = por %p116, %p117
    %s119 = ssub.s32 %s18, %s32
    %p120 = scmp.eq.s32.totalorder %s119, 0
    %s122 = sadd.s32 %s121, 1
    %s123 = scalar_select %p120, %s121, %s122
    %p126 = pneg %p120
    %p127 = scmp.eq.s32.totalorder %s10, 24
    %p128 = por %p126, %p127
    %p129 = scmp.ne.s32.totalorder %s121, %s124
    %p130 = scmp.eq.s32.totalorder %s10, 0
    %p131 = por %p129, %p130
    %p132 = scmp.ne.s32.totalorder %s121, %s124
    %p133 = scmp.eq.s32.totalorder %s15, 24
    %p134 = por %p132, %p133
    %p135 = scmp.ne.s32.totalorder %s124, %s125
    %p136 = scmp.eq.s32.totalorder %s15, 0
    %p137 = por %p135, %p136
    %p138 = scmp.ne.s32.totalorder %s124, %s125
    %p139 = scmp.eq.s32.totalorder %s16, 24
    %p140 = por %p138, %p139
    %p142 = scmp.ne.s32.totalorder %s125, %s141
    %p143 = scmp.eq.s32.totalorder %s16, 0
    %p144 = por %p142, %p143
    %s145 = ssub.s32 %s17, %s36
    %s146 = ssub.s32 %s18, %s32
    %s147 = sor.u32 %s145, %s146
    %p148 = scmp.eq.s32.totalorder %s147, 0
    %s150 = sadd.s32 %s149, 1
    %s151 = scalar_select %p148, %s149, %s150
    %p154 = pneg %p148
    %p155 = scmp.eq.s32.totalorder %s10, 24
    %p156 = por %p154, %p155
    %p157 = scmp.ne.s32.totalorder %s149, %s152
    %p158 = scmp.eq.s32.totalorder %s10, 0
    %p159 = por %p157, %p158
    %p160 = scmp.ne.s32.totalorder %s149, %s152
    %p161 = scmp.eq.s32.totalorder %s15, 24
    %p162 = por %p160, %p161
    %p163 = scmp.ne.s32.totalorder %s152, %s153
    %p164 = scmp.eq.s32.totalorder %s15, 0
    %p165 = por %p163, %p164
    %p166 = scmp.ne.s32.totalorder %s152, %s153
    %p167 = scmp.eq.s32.totalorder %s16, 24
    %p168 = por %p166, %p167
    %p170 = scmp.ne.s32.totalorder %s153, %s169
    %p171 = scmp.eq.s32.totalorder %s16, 0
    %p172 = por %p170, %p171
    %p173 = scmp.le.s32.totalorder 1, %s10
    %p174 = scmp.lt.s32.totalorder %s10, 26
    %p175 = pnand %p173, %p174
    %p176 = pneg %p175
    // Predicated region
    $region9: #{stem_conv.1} parent=5 // pred_check
      _
    $region10: #{stem_conv.1} parent=5 // pred_check_branch
      %178 = sbr.rel (%p175) target = $region12
    $region11: #{stem_conv.1} parent=5 // pred_region
      %s179 = ssub.s32 %s10, 1
      // Predicated region
      $region13: #{stem_conv.1} parent=11 // pred_check
        %p180 = pneg %p85
      $region14: #{stem_conv.1} parent=11 // pred_check_branch
        %182 = sbr.rel (%p180) target = $region16
      $region15: #{stem_conv.1} parent=11 // pred_region
        %s183 = smul.u32 19, %s22
        %p184 = scmp.lt.s32.totalorder %s183, 18
        %s185 = scalar_select %p184, %s183, 18
        %p186 = scmp.lt.s32.totalorder %s21, 0
        %s187 = scalar_select %p186, %s21, 0
        %s188 = sadd.s32 %s187, %s185
        %s189 = smul.addr %s188, 4
        %s190 = scalar_lea.vmem %s1, %s189
        %s191 = smul.u32 19, %s22
      $region16: #{stem_conv.1} parent=11 // pred_fallthru
        _
      // Predicated region
      $region17: #{stem_conv.1} parent=11 // pred_check
        %p192 = pneg %p111
      $region18: #{stem_conv.1} parent=11 // pred_check_branch
        %194 = sbr.rel (%p192) target = $region20
      $region19: #{stem_conv.1} parent=11 // pred_region
        %p195 = scmp.lt.s32.totalorder %s21, 0
        %s196 = scalar_select %p195, %s21, 0
        %s197 = scalar_lea.vmem %s2, %s196
      $region20: #{stem_conv.1} parent=11 // pred_fallthru
        _
      // Predicated region
      $region21: #{stem_conv.1} parent=11 // pred_check
        %p198 = pneg %p137
      $region22: #{stem_conv.1} parent=11 // pred_check_branch
        %200 = sbr.rel (%p198) target = $region24
      $region23: #{stem_conv.1} parent=11 // pred_region
        %p201 = scmp.lt.s32.totalorder %s21, 0
        %s202 = scalar_select %p201, %s21, 0
        %s203 = scalar_lea.vmem %s3, %s202
      $region24: #{stem_conv.1} parent=11 // pred_fallthru
        _
    $region12: #{stem_conv.1} parent=5 // pred_fallthru
      _
    %p204 = scmp.lt.s32.totalorder %s10, 25
    // Predicated region
    $region25: #{stem_conv.1} parent=5 // pred_check
      %p205 = pneg %p204
    $region26: #{stem_conv.1} parent=5 // pred_check_branch
      %207 = sbr.rel (%p205) target = $region28
    $region27: #{stem_conv.1} parent=5 // pred_region
      // Predicated region
      $region29: #{stem_conv.1} parent=27 // pred_check
        %p208 = pneg %p51
      $region30: #{stem_conv.1} parent=27 // pred_check_branch
        %210 = sbr.rel (%p208) target = $region32
      $region31: #{stem_conv.1} parent=27 // pred_region
        %s211 = smul.u32 64, %s17
        %s212 = smul.u32 2, %s19
        %p213 = scmp.lt.s32.totalorder %s211, 1599
        %s214 = scalar_select %p213, %s211, 1599
        %p215 = scmp.lt.s32.totalorder %s212, 1
        %s216 = scalar_select %p215, %s212, 1
        %s217 = smul.addr %s214, 2
        %s218 = sadd.s32 %s216, %s217
        %s219 = smul.addr %s218, 4
        %s220 = scalar_lea.vmem %s0, %s219
        %s221 = smul.u32 64, %s17
        %s222 = smul.u32 2, %s19
      $region32: #{stem_conv.1} parent=27 // pred_fallthru
        _
    $region28: #{stem_conv.1} parent=5 // pred_fallthru
      _
    %p223 = scmp.le.s32.totalorder 1, %s10
    %p224 = scmp.lt.s32.totalorder %s10, 26
    %p225 = pnand %p223, %p224
    %p226 = pneg %p225
    // Predicated region
    $region33: #{stem_conv.1} parent=5 // pred_check
      _
    $region34: #{stem_conv.1} parent=5 // pred_check_branch
      %228 = sbr.rel (%p225) target = $region36
    $region35: #{stem_conv.1} parent=5 // pred_region
      %s229 = ssub.s32 %s10, 1
      %s230 = smul.u32 64, %s20
      %s231 = smul.u32 2, %s22
      %p232 = scmp.lt.s32.totalorder %s230, 1599
      %s233 = scalar_select %p232, %s230, 1599
      %p234 = scmp.lt.s32.totalorder %s231, 1
      %s235 = scalar_select %p234, %s231, 1
      %s236 = smul.addr %s233, 2
      %s237 = sadd.s32 %s235, %s236
      %s238 = smul.addr %s237, 4
      %s239 = scalar_lea.vmem %s0, %s238
      %p240 = pneg %p57
      %p241 = pneg %p54
      %s242 = smul.u32 19, %s22
      %p243 = scmp.lt.s32.totalorder %s242, 18
      %s244 = scalar_select %p243, %s242, 18
      %p245 = scmp.lt.s32.totalorder %s21, 0
      %s246 = scalar_select %p245, %s21, 0
      %s247 = sadd.s32 %s246, %s244
      %s248 = smul.addr %s247, 4
      %s249 = scalar_lea.vmem %s1, %s248
      %p250 = pneg %p85
      %p251 = pneg %p82
      %p252 = scmp.lt.s32.totalorder %s21, 0
      %s253 = scalar_select %p252, %s21, 0
      %s254 = scalar_lea.vmem %s2, %s253
      %p255 = pneg %p111
      %p256 = pneg %p108
      %p257 = scmp.lt.s32.totalorder %s21, 0
      %s258 = scalar_select %p257, %s21, 0
      %s259 = scalar_lea.vmem %s3, %s258
      %p260 = pneg %p137
      %p261 = pneg %p134
      %p262 = pneg %p165
      %p263 = pneg %p162
      %s264 = smul.u32 64, %s20
      %p265 = scmp.lt.s32.totalorder %s264, 1599
      %s266 = scalar_select %p265, %s264, 1599
      %p267 = scmp.lt.s32.totalorder %s21, 0
      %s268 = scalar_select %p267, %s21, 0
      %s269 = sadd.s32 %s268, %s266
      %s270 = smul.addr %s269, 8
      %s271 = scalar_lea.vmem %s4, %s270
      %s272 = smul.u32 64, %s20
      %s273 = smul.u32 2, %s22
      %p274 = scmp.lt.s32.totalorder %s272, 1599
      %s275 = scalar_select %p274, %s272, 1599
      %p276 = scmp.lt.s32.totalorder %s273, 1
      %s277 = scalar_select %p276, %s273, 1
      %s278 = smul.addr %s275, 2
      %s279 = sadd.s32 %s277, %s278
      %s280 = smul.addr %s279, 4
      %s281 = scalar_lea.vmem %s0, %s280
      %s282 = smul.u32 64, %s20
      %s283 = smul.u32 2, %s22
      %s284 = smul.u32 19, %s22
      %p285 = scmp.lt.s32.totalorder %s284, 18
      %s286 = scalar_select %p285, %s284, 18
      %p287 = scmp.lt.s32.totalorder %s21, 0
      %s288 = scalar_select %p287, %s21, 0
      %s289 = sadd.s32 %s288, %s286
      %s290 = smul.addr %s289, 4
      %s291 = scalar_lea.vmem %s1, %s290
      %s292 = smul.u32 19, %s22
      %p293 = scmp.lt.s32.totalorder %s21, 0
      %s294 = scalar_select %p293, %s21, 0
      %s295 = scalar_lea.vmem %s2, %s294
      %p296 = scmp.lt.s32.totalorder %s21, 0
      %s297 = scalar_select %p296, %s21, 0
      %s298 = scalar_lea.vmem %s3, %s297
      %s299 = smul.u32 64, %s20
      %p300 = scmp.lt.s32.totalorder %s299, 1599
      %s301 = scalar_select %p300, %s299, 1599
      %p302 = scmp.lt.s32.totalorder %s21, 0
      %s303 = scalar_select %p302, %s21, 0
      %s304 = sadd.s32 %s303, %s301
      %s305 = smul.addr %s304, 8
      %s306 = scalar_lea.vmem %s4, %s305
      %s307 = smul.u32 64, %s20
      %p309 = scmp.eq.s32.totalorder %s22, 0
      // Predicated region
      $region37: #{stem_conv.1} parent=35 // pred_check
        %p310 = pneg %p309
      $region38: #{stem_conv.1} parent=35 // pred_check_branch
        %312 = sbr.rel (%p310) target = $region40
      $region39: #{stem_conv.1} parent=35 // pred_region
        %vm313 = vcmask 523264
        %314 = vst.msk [vmem:[#allocation2] sm:$0xff] %vm313, 0.0
        %315 = vst.msk [vmem:[#allocation2 + $0x8] sm:$0xff] %vm313, 0.0
        %316 = vst.msk [vmem:[#allocation2 + $0x10] sm:$0xff] %vm313, 0.0
        %317 = vst.msk [vmem:[#allocation2 + $0x18] sm:$0xff] %vm313, 0.0
        %318 = vst.msk [vmem:[#allocation2 + $0x20] sm:$0xff] %vm313, 0.0
        %319 = vst.msk [vmem:[#allocation2 + $0x28] sm:$0xff] %vm313, 0.0
        %320 = vst.msk [vmem:[#allocation2 + $0x30] sm:$0xff] %vm313, 0.0
        %321 = vst.msk [vmem:[#allocation2 + $0x38] sm:$0xff] %vm313, 0.0
        %322 = vst.msk [vmem:[#allocation2 + $0x40] sm:$0xff] %vm313, 0.0
        %323 = vst.msk [vmem:[#allocation2 + $0x48] sm:$0xff] %vm313, 0.0
        %324 = vst.msk [vmem:[#allocation2 + $0x50] sm:$0xff] %vm313, 0.0
        %325 = vst.msk [vmem:[#allocation2 + $0x58] sm:$0xff] %vm313, 0.0
        %326 = vst.msk [vmem:[#allocation2 + $0x60] sm:$0xff] %vm313, 0.0
        %327 = vst.msk [vmem:[#allocation2 + $0x68] sm:$0xff] %vm313, 0.0
        %328 = vst.msk [vmem:[#allocation2 + $0x70] sm:$0xff] %vm313, 0.0
        %329 = vst.msk [vmem:[#allocation2 + $0x78] sm:$0xff] %vm313, 0.0
        %330 = vst.msk [vmem:[#allocation2 + $0x80] sm:$0xff] %vm313, 0.0
        %331 = vst.msk [vmem:[#allocation2 + $0x88] sm:$0xff] %vm313, 0.0
        %332 = vst.msk [vmem:[#allocation2 + $0x90] sm:$0xff] %vm313, 0.0
        %333 = vst.msk [vmem:[#allocation2 + $0x98] sm:$0xff] %vm313, 0.0
        %334 = vst.msk [vmem:[#allocation2 + $0xa0] sm:$0xff] %vm313, 0.0
        %335 = vst.msk [vmem:[#allocation2 + $0xa8] sm:$0xff] %vm313, 0.0
        %336 = vst.msk [vmem:[#allocation2 + $0xb0] sm:$0xff] %vm313, 0.0
        %337 = vst.msk [vmem:[#allocation2 + $0xb8] sm:$0xff] %vm313, 0.0
        %338 = vst.msk [vmem:[#allocation2 + $0xc0] sm:$0xff] %vm313, 0.0
        %339 = vst.msk [vmem:[#allocation2 + $0xc8] sm:$0xff] %vm313, 0.0
        %340 = vst.msk [vmem:[#allocation2 + $0xd0] sm:$0xff] %vm313, 0.0
        %341 = vst.msk [vmem:[#allocation2 + $0xd8] sm:$0xff] %vm313, 0.0
        %342 = vst.msk [vmem:[#allocation2 + $0xe0] sm:$0xff] %vm313, 0.0
        %343 = vst.msk [vmem:[#allocation2 + $0xe8] sm:$0xff] %vm313, 0.0
        %344 = vst.msk [vmem:[#allocation2 + $0xf0] sm:$0xff] %vm313, 0.0
        %345 = vst.msk [vmem:[#allocation2 + $0xf8] sm:$0xff] %vm313, 0.0
        %346 = vst.msk [vmem:[#allocation2 + $0x100] sm:$0xff] %vm313, 0.0
        %347 = vst.msk [vmem:[#allocation2 + $0x108] sm:$0xff] %vm313, 0.0
        %348 = vst.msk [vmem:[#allocation2 + $0x110] sm:$0xff] %vm313, 0.0
        %349 = vst.msk [vmem:[#allocation2 + $0x118] sm:$0xff] %vm313, 0.0
        %350 = vst.msk [vmem:[#allocation2 + $0x120] sm:$0xff] %vm313, 0.0
        %351 = vst.msk [vmem:[#allocation2 + $0x128] sm:$0xff] %vm313, 0.0
        %352 = vst.msk [vmem:[#allocation2 + $0x130] sm:$0xff] %vm313, 0.0
        %353 = vst.msk [vmem:[#allocation2 + $0x138] sm:$0xff] %vm313, 0.0
        %354 = vst.msk [vmem:[#allocation2 + $0x140] sm:$0xff] %vm313, 0.0
        %355 = vst.msk [vmem:[#allocation2 + $0x148] sm:$0xff] %vm313, 0.0
        %356 = vst.msk [vmem:[#allocation2 + $0x150] sm:$0xff] %vm313, 0.0
        %357 = vst.msk [vmem:[#allocation2 + $0x158] sm:$0xff] %vm313, 0.0
        %358 = vst.msk [vmem:[#allocation2 + $0x160] sm:$0xff] %vm313, 0.0
        %359 = vst.msk [vmem:[#allocation2 + $0x168] sm:$0xff] %vm313, 0.0
        %360 = vst.msk [vmem:[#allocation2 + $0x170] sm:$0xff] %vm313, 0.0
        %361 = vst.msk [vmem:[#allocation2 + $0x178] sm:$0xff] %vm313, 0.0
        %362 = vst.msk [vmem:[#allocation2 + $0x180] sm:$0xff] %vm313, 0.0
        %363 = vst.msk [vmem:[#allocation2 + $0x188] sm:$0xff] %vm313, 0.0
        %364 = vst.msk [vmem:[#allocation2 + $0x190] sm:$0xff] %vm313, 0.0
        %365 = vst.msk [vmem:[#allocation2 + $0x198] sm:$0xff] %vm313, 0.0
        %366 = vst.msk [vmem:[#allocation2 + $0x1a0] sm:$0xff] %vm313, 0.0
        %367 = vst.msk [vmem:[#allocation2 + $0x1a8] sm:$0xff] %vm313, 0.0
        %368 = vst.msk [vmem:[#allocation2 + $0x1b0] sm:$0xff] %vm313, 0.0
        %369 = vst.msk [vmem:[#allocation2 + $0x1b8] sm:$0xff] %vm313, 0.0
        %370 = vst.msk [vmem:[#allocation2 + $0x1c0] sm:$0xff] %vm313, 0.0
        %371 = vst.msk [vmem:[#allocation2 + $0x1c8] sm:$0xff] %vm313, 0.0
        %372 = vst.msk [vmem:[#allocation2 + $0x1d0] sm:$0xff] %vm313, 0.0
        %373 = vst.msk [vmem:[#allocation2 + $0x1d8] sm:$0xff] %vm313, 0.0
        %374 = vst.msk [vmem:[#allocation2 + $0x1e0] sm:$0xff] %vm313, 0.0
        %375 = vst.msk [vmem:[#allocation2 + $0x1e8] sm:$0xff] %vm313, 0.0
        %376 = vst.msk [vmem:[#allocation2 + $0x1f0] sm:$0xff] %vm313, 0.0
        %377 = vst.msk [vmem:[#allocation2 + $0x1f8] sm:$0xff] %vm313, 0.0
      $region40: #{stem_conv.1} parent=35 // pred_fallthru
        _
      %v378 = vld [vmem:[%s281] sm:$0xff]
      %v379 = vld [vmem:[%s281 + $0x8] sm:$0xff]
      %v380 = vld [vmem:[%s281 + $0x10] sm:$0xff]
      %v381 = vld [vmem:[%s281 + $0x18] sm:$0xff]
      %v382 = vld [vmem:[%s281 + $0x20] sm:$0xff]
      %v383 = vld [vmem:[%s281 + $0x28] sm:$0xff]
      %v384 = vld [vmem:[%s281 + $0x30] sm:$0xff]
      %v385 = vld [vmem:[%s281 + $0x38] sm:$0xff]
      %v386 = vld [vmem:[%s281 + $0x40] sm:$0xff]
      %v387 = vld [vmem:[%s281 + $0x48] sm:$0xff]
      %v388 = vld [vmem:[%s281 + $0x50] sm:$0xff]
      %v389 = vld [vmem:[%s281 + $0x58] sm:$0xff]
      %v390 = vld [vmem:[%s281 + $0x60] sm:$0xff]
      %v391 = vld [vmem:[%s281 + $0x68] sm:$0xff]
      %v392 = vld [vmem:[%s281 + $0x70] sm:$0xff]
      %v393 = vld [vmem:[%s281 + $0x78] sm:$0xff]
      %v394 = vld [vmem:[%s281 + $0x80] sm:$0xff]
      %v395 = vld [vmem:[%s281 + $0x88] sm:$0xff]
      %v396 = vld [vmem:[%s281 + $0x90] sm:$0xff]
      %v397 = vld [vmem:[%s281 + $0x98] sm:$0xff]
      %v398 = vld [vmem:[%s281 + $0xa0] sm:$0xff]
      %v399 = vld [vmem:[%s281 + $0xa8] sm:$0xff]
      %v400 = vld [vmem:[%s281 + $0xb0] sm:$0xff]
      %v401 = vld [vmem:[%s281 + $0xb8] sm:$0xff]
      %v402 = vld [vmem:[%s281 + $0xc0] sm:$0xff]
      %v403 = vld [vmem:[%s281 + $0xc8] sm:$0xff]
      %v404 = vld [vmem:[%s281 + $0xd0] sm:$0xff]
      %v405 = vld [vmem:[%s281 + $0xd8] sm:$0xff]
      %v406 = vld [vmem:[%s281 + $0xe0] sm:$0xff]
      %v407 = vld [vmem:[%s281 + $0xe8] sm:$0xff]
      %v408 = vld [vmem:[%s281 + $0xf0] sm:$0xff]
      %v409 = vld [vmem:[%s281 + $0xf8] sm:$0xff]
      %v410 = vld [vmem:[%s281 + $0x100] sm:$0xff]
      %v411 = vld [vmem:[%s281 + $0x108] sm:$0xff]
      %v412 = vld [vmem:[%s281 + $0x110] sm:$0xff]
      %v413 = vld [vmem:[%s281 + $0x118] sm:$0xff]
      %v414 = vld [vmem:[%s281 + $0x120] sm:$0xff]
      %v415 = vld [vmem:[%s281 + $0x128] sm:$0xff]
      %v416 = vld [vmem:[%s281 + $0x130] sm:$0xff]
      %v417 = vld [vmem:[%s281 + $0x138] sm:$0xff]
      %v418 = vld [vmem:[%s281 + $0x140] sm:$0xff]
      %v419 = vld [vmem:[%s281 + $0x148] sm:$0xff]
      %v420 = vld [vmem:[%s281 + $0x150] sm:$0xff]
      %v421 = vld [vmem:[%s281 + $0x158] sm:$0xff]
      %v422 = vld [vmem:[%s281 + $0x160] sm:$0xff]
      %v423 = vld [vmem:[%s281 + $0x168] sm:$0xff]
      %v424 = vld [vmem:[%s281 + $0x170] sm:$0xff]
      %v425 = vld [vmem:[%s281 + $0x178] sm:$0xff]
      %v426 = vld [vmem:[%s281 + $0x180] sm:$0xff]
      %v427 = vld [vmem:[%s281 + $0x188] sm:$0xff]
      %v428 = vld [vmem:[%s281 + $0x190] sm:$0xff]
      %v429 = vld [vmem:[%s281 + $0x198] sm:$0xff]
      %v430 = vld [vmem:[%s281 + $0x1a0] sm:$0xff]
      %v431 = vld [vmem:[%s281 + $0x1a8] sm:$0xff]
      %v432 = vld [vmem:[%s281 + $0x1b0] sm:$0xff]
      %v433 = vld [vmem:[%s281 + $0x1b8] sm:$0xff]
      %v434 = vld [vmem:[%s281 + $0x1c0] sm:$0xff]
      %v435 = vld [vmem:[%s281 + $0x1c8] sm:$0xff]
      %v436 = vld [vmem:[%s281 + $0x1d0] sm:$0xff]
      %v437 = vld [vmem:[%s281 + $0x1d8] sm:$0xff]
      %v438 = vld [vmem:[%s281 + $0x1e0] sm:$0xff]
      %v439 = vld [vmem:[%s281 + $0x1e8] sm:$0xff]
      %v440 = vld [vmem:[%s281 + $0x1f0] sm:$0xff]
      %v441 = vld [vmem:[%s281 + $0x1f8] sm:$0xff]
      %v442 = vld [vmem:[#allocation2] sm:$0xff]
      %v443 = vld [vmem:[#allocation2 + $0x8] sm:$0xff]
      %v444 = vld [vmem:[#allocation2 + $0x10] sm:$0xff]
      %v445 = vld [vmem:[#allocation2 + $0x18] sm:$0xff]
      %v446 = vld [vmem:[#allocation2 + $0x20] sm:$0xff]
      %v447 = vld [vmem:[#allocation2 + $0x28] sm:$0xff]
      %v448 = vld [vmem:[#allocation2 + $0x30] sm:$0xff]
      %v449 = vld [vmem:[#allocation2 + $0x38] sm:$0xff]
      %v450 = vld [vmem:[#allocation2 + $0x40] sm:$0xff]
      %v451 = vld [vmem:[#allocation2 + $0x48] sm:$0xff]
      %v452 = vld [vmem:[#allocation2 + $0x50] sm:$0xff]
      %v453 = vld [vmem:[#allocation2 + $0x58] sm:$0xff]
      %v454 = vld [vmem:[#allocation2 + $0x60] sm:$0xff]
      %v455 = vld [vmem:[#allocation2 + $0x68] sm:$0xff]
      %v456 = vld [vmem:[#allocation2 + $0x70] sm:$0xff]
      %v457 = vld [vmem:[#allocation2 + $0x78] sm:$0xff]
      %v458 = vld [vmem:[#allocation2 + $0x80] sm:$0xff]
      %v459 = vld [vmem:[#allocation2 + $0x88] sm:$0xff]
      %v460 = vld [vmem:[#allocation2 + $0x90] sm:$0xff]
      %v461 = vld [vmem:[#allocation2 + $0x98] sm:$0xff]
      %v462 = vld [vmem:[#allocation2 + $0xa0] sm:$0xff]
      %v463 = vld [vmem:[#allocation2 + $0xa8] sm:$0xff]
      %v464 = vld [vmem:[#allocation2 + $0xb0] sm:$0xff]
      %v465 = vld [vmem:[#allocation2 + $0xb8] sm:$0xff]
      %v466 = vld [vmem:[#allocation2 + $0xc0] sm:$0xff]
      %v467 = vld [vmem:[#allocation2 + $0xc8] sm:$0xff]
      %v468 = vld [vmem:[#allocation2 + $0xd0] sm:$0xff]
      %v469 = vld [vmem:[#allocation2 + $0xd8] sm:$0xff]
      %v470 = vld [vmem:[#allocation2 + $0xe0] sm:$0xff]
      %v471 = vld [vmem:[#allocation2 + $0xe8] sm:$0xff]
      %v472 = vld [vmem:[#allocation2 + $0xf0] sm:$0xff]
      %v473 = vld [vmem:[#allocation2 + $0xf8] sm:$0xff]
      %v474 = vld [vmem:[#allocation2 + $0x100] sm:$0xff]
      %v475 = vld [vmem:[#allocation2 + $0x108] sm:$0xff]
      %v476 = vld [vmem:[#allocation2 + $0x110] sm:$0xff]
      %v477 = vld [vmem:[#allocation2 + $0x118] sm:$0xff]
      %v478 = vld [vmem:[#allocation2 + $0x120] sm:$0xff]
      %v479 = vld [vmem:[#allocation2 + $0x128] sm:$0xff]
      %v480 = vld [vmem:[#allocation2 + $0x130] sm:$0xff]
      %v481 = vld [vmem:[#allocation2 + $0x138] sm:$0xff]
      %v482 = vld [vmem:[#allocation2 + $0x140] sm:$0xff]
      %v483 = vld [vmem:[#allocation2 + $0x148] sm:$0xff]
      %v484 = vld [vmem:[#allocation2 + $0x150] sm:$0xff]
      %v485 = vld [vmem:[#allocation2 + $0x158] sm:$0xff]
      %v486 = vld [vmem:[#allocation2 + $0x160] sm:$0xff]
      %v487 = vld [vmem:[#allocation2 + $0x168] sm:$0xff]
      %v488 = vld [vmem:[#allocation2 + $0x170] sm:$0xff]
      %v489 = vld [vmem:[#allocation2 + $0x178] sm:$0xff]
      %v490 = vld [vmem:[#allocation2 + $0x180] sm:$0xff]
      %v491 = vld [vmem:[#allocation2 + $0x188] sm:$0xff]
      %v492 = vld [vmem:[#allocation2 + $0x190] sm:$0xff]
      %v493 = vld [vmem:[#allocation2 + $0x198] sm:$0xff]
      %v494 = vld [vmem:[#allocation2 + $0x1a0] sm:$0xff]
      %v495 = vld [vmem:[#allocation2 + $0x1a8] sm:$0xff]
      %v496 = vld [vmem:[#allocation2 + $0x1b0] sm:$0xff]
      %v497 = vld [vmem:[#allocation2 + $0x1b8] sm:$0xff]
      %v498 = vld [vmem:[#allocation2 + $0x1c0] sm:$0xff]
      %v499 = vld [vmem:[#allocation2 + $0x1c8] sm:$0xff]
      %v500 = vld [vmem:[#allocation2 + $0x1d0] sm:$0xff]
      %v501 = vld [vmem:[#allocation2 + $0x1d8] sm:$0xff]
      %v502 = vld [vmem:[#allocation2 + $0x1e0] sm:$0xff]
      %v503 = vld [vmem:[#allocation2 + $0x1e8] sm:$0xff]
      %v504 = vld [vmem:[#allocation2 + $0x1f0] sm:$0xff]
      %v505 = vld [vmem:[#allocation2 + $0x1f8] sm:$0xff]
      %v506 = vld [vmem:[%s291] sm:$0xf]
      %v507 = vld [vmem:[%s291 + $0x4] sm:$0xf]
      %v508 = vld [vmem:[%s291 + $0x8] sm:$0xf]
      %v509 = vld [vmem:[%s291 + $0xc] sm:$0xf]
      %v510 = vld [vmem:[%s291 + $0x10] sm:$0xf]
      %v511 = vld [vmem:[%s291 + $0x14] sm:$0xf]
      %v512 = vld [vmem:[%s291 + $0x18] sm:$0xf]
      %v513 = vld [vmem:[%s291 + $0x1c] sm:$0xf]
      %v514 = vld [vmem:[%s291 + $0x20] sm:$0xf]
      %v515 = vld [vmem:[%s291 + $0x24] sm:$0xf]
      %v516 = vld [vmem:[%s291 + $0x28] sm:$0xf]
      %v517 = vld [vmem:[%s291 + $0x2c] sm:$0xf]
      %v518 = vld [vmem:[%s291 + $0x30] sm:$0xf]
      %v519 = vld [vmem:[%s291 + $0x34] sm:$0xf]
      %v520 = vld [vmem:[%s291 + $0x38] sm:$0xf]
      %v521 = vld [vmem:[%s291 + $0x3c] sm:$0xf]
      %v522 = vld [vmem:[%s291 + $0x40] sm:$0xf]
      %v523 = vld [vmem:[%s291 + $0x44] sm:$0xf]
      %v524 = vld [vmem:[%s291 + $0x48] sm:$0x3]
      %v589 = vunpack.c.l.b16 %v378
      %v590 = vunpack.c.h.b16 %v378
      %v591 = vunpack.c.l.b16 %v379
      %v592 = vunpack.c.h.b16 %v379
      %v593 = vunpack.c.l.b16 %v380
      %v594 = vunpack.c.h.b16 %v380
      %v595 = vunpack.c.l.b16 %v381
      %v596 = vunpack.c.h.b16 %v381
      %v597 = vunpack.c.l.b16 %v382
      %v598 = vunpack.c.h.b16 %v382
      %v599 = vunpack.c.l.b16 %v383
      %v600 = vunpack.c.h.b16 %v383
      %v601 = vunpack.c.l.b16 %v384
      %v602 = vunpack.c.h.b16 %v384
      %v603 = vunpack.c.l.b16 %v385
      %v604 = vunpack.c.h.b16 %v385
      %v605 = vunpack.c.l.b16 %v386
      %v606 = vunpack.c.h.b16 %v386
      %v607 = vunpack.c.l.b16 %v387
      %v608 = vunpack.c.h.b16 %v387
      %v609 = vunpack.c.l.b16 %v388
      %v610 = vunpack.c.h.b16 %v388
      %v611 = vunpack.c.l.b16 %v389
      %v612 = vunpack.c.h.b16 %v389
      %v613 = vunpack.c.l.b16 %v390
      %v614 = vunpack.c.h.b16 %v390
      %v615 = vunpack.c.l.b16 %v391
      %v616 = vunpack.c.h.b16 %v391
      %v617 = vunpack.c.l.b16 %v392
      %v618 = vunpack.c.h.b16 %v392
      %v619 = vunpack.c.l.b16 %v393
      %v620 = vunpack.c.h.b16 %v393
      %v621 = vunpack.c.l.b16 %v394
      %v622 = vunpack.c.h.b16 %v394
      %v623 = vunpack.c.l.b16 %v395
      %v624 = vunpack.c.h.b16 %v395
      %v625 = vunpack.c.l.b16 %v396
      %v626 = vunpack.c.h.b16 %v396
      %v627 = vunpack.c.l.b16 %v397
      %v628 = vunpack.c.h.b16 %v397
      %v629 = vunpack.c.l.b16 %v398
      %v630 = vunpack.c.h.b16 %v398
      %v631 = vunpack.c.l.b16 %v399
      %v632 = vunpack.c.h.b16 %v399
      %v633 = vunpack.c.l.b16 %v400
      %v634 = vunpack.c.h.b16 %v400
      %v635 = vunpack.c.l.b16 %v401
      %v636 = vunpack.c.h.b16 %v401
      %v637 = vunpack.c.l.b16 %v402
      %v638 = vunpack.c.h.b16 %v402
      %v639 = vunpack.c.l.b16 %v403
      %v640 = vunpack.c.h.b16 %v403
      %v641 = vunpack.c.l.b16 %v404
      %v642 = vunpack.c.h.b16 %v404
      %v643 = vunpack.c.l.b16 %v405
      %v644 = vunpack.c.h.b16 %v405
      %v645 = vunpack.c.l.b16 %v406
      %v646 = vunpack.c.h.b16 %v406
      %v647 = vunpack.c.l.b16 %v407
      %v648 = vunpack.c.h.b16 %v407
      %v649 = vunpack.c.l.b16 %v408
      %v650 = vunpack.c.h.b16 %v408
      %v651 = vunpack.c.l.b16 %v409
      %v652 = vunpack.c.h.b16 %v409
      %v653 = vunpack.c.l.b16 %v410
      %v654 = vunpack.c.h.b16 %v410
      %v655 = vunpack.c.l.b16 %v411
      %v656 = vunpack.c.h.b16 %v411
      %v657 = vunpack.c.l.b16 %v412
      %v658 = vunpack.c.h.b16 %v412
      %v659 = vunpack.c.l.b16 %v413
      %v660 = vunpack.c.h.b16 %v413
      %v661 = vunpack.c.l.b16 %v414
      %v662 = vunpack.c.h.b16 %v414
      %v663 = vunpack.c.l.b16 %v415
      %v664 = vunpack.c.h.b16 %v415
      %v665 = vunpack.c.l.b16 %v416
      %v666 = vunpack.c.h.b16 %v416
      %v667 = vunpack.c.l.b16 %v417
      %v668 = vunpack.c.h.b16 %v417
      %v669 = vunpack.c.l.b16 %v418
      %v670 = vunpack.c.h.b16 %v418
      %v671 = vunpack.c.l.b16 %v419
      %v672 = vunpack.c.h.b16 %v419
      %v673 = vunpack.c.l.b16 %v420
      %v674 = vunpack.c.h.b16 %v420
      %v675 = vunpack.c.l.b16 %v421
      %v676 = vunpack.c.h.b16 %v421
      %v677 = vunpack.c.l.b16 %v422
      %v678 = vunpack.c.h.b16 %v422
      %v679 = vunpack.c.l.b16 %v423
      %v680 = vunpack.c.h.b16 %v423
      %v681 = vunpack.c.l.b16 %v424
      %v682 = vunpack.c.h.b16 %v424
      %v683 = vunpack.c.l.b16 %v425
      %v684 = vunpack.c.h.b16 %v425
      %v685 = vunpack.c.l.b16 %v426
      %v686 = vunpack.c.h.b16 %v426
      %v687 = vunpack.c.l.b16 %v427
      %v688 = vunpack.c.h.b16 %v427
      %v689 = vunpack.c.l.b16 %v428
      %v690 = vunpack.c.h.b16 %v428
      %v691 = vunpack.c.l.b16 %v429
      %v692 = vunpack.c.h.b16 %v429
      %v693 = vunpack.c.l.b16 %v430
      %v694 = vunpack.c.h.b16 %v430
      %v695 = vunpack.c.l.b16 %v431
      %v696 = vunpack.c.h.b16 %v431
      %v697 = vunpack.c.l.b16 %v432
      %v698 = vunpack.c.h.b16 %v432
      %v699 = vunpack.c.l.b16 %v433
      %v700 = vunpack.c.h.b16 %v433
      %v701 = vunpack.c.l.b16 %v434
      %v702 = vunpack.c.h.b16 %v434
      %v703 = vunpack.c.l.b16 %v435
      %v704 = vunpack.c.h.b16 %v435
      %v705 = vunpack.c.l.b16 %v436
      %v706 = vunpack.c.h.b16 %v436
      %v707 = vunpack.c.l.b16 %v437
      %v708 = vunpack.c.h.b16 %v437
      %v709 = vunpack.c.l.b16 %v438
      %v710 = vunpack.c.h.b16 %v438
      %v711 = vunpack.c.l.b16 %v439
      %v712 = vunpack.c.h.b16 %v439
      %v713 = vunpack.c.l.b16 %v440
      %v714 = vunpack.c.h.b16 %v440
      %v715 = vunpack.c.l.b16 %v441
      %v716 = vunpack.c.h.b16 %v441
      %v717 = vpack.c.b16 %v591, %v589
      %v718 = vpack.c.b16 %v592, %v590
      %v719 = vpack.c.b16 %v595, %v593
      %v720 = vpack.c.b16 %v596, %v594
      %v721 = vpack.c.b16 %v599, %v597
      %v722 = vpack.c.b16 %v600, %v598
      %v723 = vpack.c.b16 %v603, %v601
      %v724 = vpack.c.b16 %v604, %v602
      %v725 = vpack.c.b16 %v607, %v605
      %v726 = vpack.c.b16 %v608, %v606
      %v727 = vpack.c.b16 %v611, %v609
      %v728 = vpack.c.b16 %v612, %v610
      %v729 = vpack.c.b16 %v615, %v613
      %v730 = vpack.c.b16 %v616, %v614
      %v731 = vpack.c.b16 %v619, %v617
      %v732 = vpack.c.b16 %v620, %v618
      %v733 = vpack.c.b16 %v623, %v621
      %v734 = vpack.c.b16 %v624, %v622
      %v735 = vpack.c.b16 %v627, %v625
      %v736 = vpack.c.b16 %v628, %v626
      %v737 = vpack.c.b16 %v631, %v629
      %v738 = vpack.c.b16 %v632, %v630
      %v739 = vpack.c.b16 %v635, %v633
      %v740 = vpack.c.b16 %v636, %v634
      %v741 = vpack.c.b16 %v639, %v637
      %v742 = vpack.c.b16 %v640, %v638
      %v743 = vpack.c.b16 %v643, %v641
      %v744 = vpack.c.b16 %v644, %v642
      %v745 = vpack.c.b16 %v647, %v645
      %v746 = vpack.c.b16 %v648, %v646
      %v747 = vpack.c.b16 %v651, %v649
      %v748 = vpack.c.b16 %v652, %v650
      %v749 = vpack.c.b16 %v655, %v653
      %v750 = vpack.c.b16 %v656, %v654
      %v751 = vpack.c.b16 %v659, %v657
      %v752 = vpack.c.b16 %v660, %v658
      %v753 = vpack.c.b16 %v663, %v661
      %v754 = vpack.c.b16 %v664, %v662
      %v755 = vpack.c.b16 %v667, %v665
      %v756 = vpack.c.b16 %v668, %v666
      %v757 = vpack.c.b16 %v671, %v669
      %v758 = vpack.c.b16 %v672, %v670
      %v759 = vpack.c.b16 %v675, %v673
      %v760 = vpack.c.b16 %v676, %v674
      %v761 = vpack.c.b16 %v679, %v677
      %v762 = vpack.c.b16 %v680, %v678
      %v763 = vpack.c.b16 %v683, %v681
      %v764 = vpack.c.b16 %v684, %v682
      %v765 = vpack.c.b16 %v687, %v685
      %v766 = vpack.c.b16 %v688, %v686
      %v767 = vpack.c.b16 %v691, %v689
      %v768 = vpack.c.b16 %v692, %v690
      %v769 = vpack.c.b16 %v695, %v693
      %v770 = vpack.c.b16 %v696, %v694
      %v771 = vpack.c.b16 %v699, %v697
      %v772 = vpack.c.b16 %v700, %v698
      %v773 = vpack.c.b16 %v703, %v701
      %v774 = vpack.c.b16 %v704, %v702
      %v775 = vpack.c.b16 %v707, %v705
      %v776 = vpack.c.b16 %v708, %v706
      %v777 = vpack.c.b16 %v711, %v709
      %v778 = vpack.c.b16 %v712, %v710
      %v779 = vpack.c.b16 %v715, %v713
      %v780 = vpack.c.b16 %v716, %v714
      %v832 = vunpack.c.l.b16 %v506
      %v833 = vunpack.c.l.b16 %v507
      %v834 = vunpack.c.l.b16 %v508
      %v835 = vunpack.c.l.b16 %v509
      %v836 = vunpack.c.l.b16 %v510
      %v837 = vunpack.c.l.b16 %v511
      %v838 = vunpack.c.l.b16 %v512
      %v839 = vunpack.c.l.b16 %v513
      %v840 = vunpack.c.l.b16 %v514
      %v841 = vunpack.c.l.b16 %v515
      %v842 = vunpack.c.l.b16 %v516
      %v843 = vunpack.c.l.b16 %v517
      %v844 = vunpack.c.l.b16 %v518
      %v845 = vunpack.c.l.b16 %v519
      %v846 = vunpack.c.l.b16 %v520
      %v847 = vunpack.c.l.b16 %v521
      %v848 = vunpack.c.l.b16 %v522
      %v849 = vunpack.c.l.b16 %v523
      %v850 = vunpack.c.l.b16 %v524
      %v851 = vpack.c.b16 %v833, %v832
      %v852 = vpack.c.b16 %v835, %v834
      %v853 = vpack.c.b16 %v837, %v836
      %v854 = vpack.c.b16 %v839, %v838
      %v855 = vpack.c.b16 %v841, %v840
      %v856 = vpack.c.b16 %v843, %v842
      %v857 = vpack.c.b16 %v845, %v844
      %v858 = vpack.c.b16 %v847, %v846
      %v859 = vpack.c.b16 %v849, %v848
      %v860 = vpack.c.b16 %v850, %v850
      %vm870 = vcmask 154624
      %v872 = vsel %vm870, %v718, 0
      %v875 = vsel %vm870, %v720, 0
      %v878 = vsel %vm870, %v722, 0
      %v881 = vsel %vm870, %v724, 0
      %v884 = vsel %vm870, %v726, 0
      %v887 = vsel %vm870, %v728, 0
      %v890 = vsel %vm870, %v730, 0
      %v893 = vsel %vm870, %v732, 0
      %v896 = vsel %vm870, %v734, 0
      %v899 = vsel %vm870, %v736, 0
      %v902 = vsel %vm870, %v738, 0
      %v905 = vsel %vm870, %v740, 0
      %v908 = vsel %vm870, %v742, 0
      %v911 = vsel %vm870, %v744, 0
      %v914 = vsel %vm870, %v746, 0
      %v917 = vsel %vm870, %v748, 0
      %v920 = vsel %vm870, %v750, 0
      %v923 = vsel %vm870, %v752, 0
      %v926 = vsel %vm870, %v754, 0
      %v929 = vsel %vm870, %v756, 0
      %v932 = vsel %vm870, %v758, 0
      %v935 = vsel %vm870, %v760, 0
      %v938 = vsel %vm870, %v762, 0
      %v941 = vsel %vm870, %v764, 0
      %v944 = vsel %vm870, %v766, 0
      %v947 = vsel %vm870, %v768, 0
      %v950 = vsel %vm870, %v770, 0
      %v953 = vsel %vm870, %v772, 0
      %v956 = vsel %vm870, %v774, 0
      %v959 = vsel %vm870, %v776, 0
      %v962 = vsel %vm870, %v778, 0
      %v965 = vsel %vm870, %v780, 0
      %vm967 = vcmask 1040384
      %vm968 = vcmask 1041408
      %v969 = vsel %vm967, 4294967295, 65535
      %v970 = vsel %vm968, %v969, 0
      %v972 = vand.u32 %v860, %v970
      %974 = vmatprep.subr.bf16.mxu0 0
      %975 = vmatpush1.bf16.msra.mxu0 %v858
      %976 = vmatprep.subr.bf16.mxu0 0
      %977 = vmatpush1.bf16.msra.mxu0 %v857
      %978 = vmatprep.subr.bf16.mxu0 0
      %979 = vmatpush1.bf16.msra.mxu0 %v856
      %980 = vmatprep.subr.bf16.mxu0 0
      %981 = vmatpush1.bf16.msra.mxu0 %v855
      %982 = vmatprep.subr.bf16.mxu0 0
      %983 = vmatpush1.bf16.msra.mxu0 %v854
      %984 = vmatprep.subr.bf16.mxu0 0
      %985 = vmatpush1.bf16.msra.mxu0 %v853
      %986 = vmatprep.subr.bf16.mxu0 0
      %987 = vmatpush1.bf16.msra.mxu0 %v852
      %988 = vmatprep.subr.bf16.mxu0 0
      %989 = vmatpush1.bf16.msra.mxu0 %v851
      %990 = vmatprep.subr.bf16.mxu0 0
      %991 = vmatpush2.bf16.msra.mxu0 0
      %992 = vmatprep.subr.bf16.mxu0 0
      %993 = vmatpush2.bf16.msra.mxu0 0
      %994 = vmatprep.subr.bf16.mxu0 0
      %995 = vmatpush2.bf16.msra.mxu0 0
      %996 = vmatprep.subr.bf16.mxu0 0
      %997 = vmatpush2.bf16.msra.mxu0 0
      %998 = vmatprep.subr.bf16.mxu0 0
      %999 = vmatpush2.bf16.msra.mxu0 0
      %1000 = vmatprep.subr.bf16.mxu0 0
      %1001 = vmatpush2.bf16.msra.mxu0 0
      %1002 = vmatprep.subr.bf16.mxu0 0
      %1003 = vmatpush2.bf16.msra.mxu0 %v972
      %1004 = vmatprep.subr.bf16.mxu0 0
      %1005 = vmatpush2.bf16.msra.mxu0 %v859
      %1006 = vmatprep.mubr.bf16.mxu0 %v872
      %1007 = vmatmul.mubr.bf16.gmra.mxu0 %v717
      %v1008 = vpop.f32.mrf.mxu0
      %v1009 = vadd.f32 0.0, %v1008
      %v1010 = vpop.f32.mrf.mxu0
      %v1011 = vpop.f32.mrf.mxu0
      %v1012 = vadd.f32 0.0, %v1011
      %v1013 = vpop.f32.mrf.mxu0
      %1014 = vmatprep.mubr.bf16.mxu0 %v875
      %1015 = vmatmul.mubr.bf16.gmra.mxu0 %v719
      %v1016 = vpop.f32.mrf.mxu0
      %v1017 = vadd.f32 0.0, %v1016
      %v1018 = vpop.f32.mrf.mxu0
      %v1019 = vpop.f32.mrf.mxu0
      %v1020 = vadd.f32 0.0, %v1019
      %v1021 = vpop.f32.mrf.mxu0
      %1022 = vmatprep.mubr.bf16.mxu0 %v878
      %1023 = vmatmul.mubr.bf16.gmra.mxu0 %v721
      %v1024 = vpop.f32.mrf.mxu0
      %v1025 = vadd.f32 0.0, %v1024
      %v1026 = vpop.f32.mrf.mxu0
      %v1027 = vpop.f32.mrf.mxu0
      %v1028 = vadd.f32 0.0, %v1027
      %v1029 = vpop.f32.mrf.mxu0
      %1030 = vmatprep.mubr.bf16.mxu0 %v881
      %1031 = vmatmul.mubr.bf16.gmra.mxu0 %v723
      %v1032 = vpop.f32.mrf.mxu0
      %v1033 = vadd.f32 0.0, %v1032
      %v1034 = vpop.f32.mrf.mxu0
      %v1035 = vpop.f32.mrf.mxu0
      %v1036 = vadd.f32 0.0, %v1035
      %v1037 = vpop.f32.mrf.mxu0
      %1038 = vmatprep.mubr.bf16.mxu0 %v884
      %1039 = vmatmul.mubr.bf16.gmra.mxu0 %v725
      %v1040 = vpop.f32.mrf.mxu0
      %v1041 = vadd.f32 0.0, %v1040
      %v1042 = vpop.f32.mrf.mxu0
      %v1043 = vpop.f32.mrf.mxu0
      %v1044 = vadd.f32 0.0, %v1043
      %v1045 = vpop.f32.mrf.mxu0
      %1046 = vmatprep.mubr.bf16.mxu0 %v887
      %1047 = vmatmul.mubr.bf16.gmra.mxu0 %v727
      %v1048 = vpop.f32.mrf.mxu0
      %v1049 = vadd.f32 0.0, %v1048
      %v1050 = vpop.f32.mrf.mxu0
      %v1051 = vpop.f32.mrf.mxu0
      %v1052 = vadd.f32 0.0, %v1051
      %v1053 = vpop.f32.mrf.mxu0
      %1054 = vmatprep.mubr.bf16.mxu0 %v890
      %1055 = vmatmul.mubr.bf16.gmra.mxu0 %v729
      %v1056 = vpop.f32.mrf.mxu0
      %v1057 = vadd.f32 0.0, %v1056
      %v1058 = vpop.f32.mrf.mxu0
      %v1059 = vpop.f32.mrf.mxu0
      %v1060 = vadd.f32 0.0, %v1059
      %v1061 = vpop.f32.mrf.mxu0
      %1062 = vmatprep.mubr.bf16.mxu0 %v893
      %1063 = vmatmul.mubr.bf16.gmra.mxu0 %v731
      %v1064 = vpop.f32.mrf.mxu0
      %v1065 = vadd.f32 0.0, %v1064
      %v1066 = vpop.f32.mrf.mxu0
      %v1067 = vpop.f32.mrf.mxu0
      %v1068 = vadd.f32 0.0, %v1067
      %v1069 = vpop.f32.mrf.mxu0
      %1070 = vmatprep.mubr.bf16.mxu0 %v896
      %1071 = vmatmul.mubr.bf16.gmra.mxu0 %v733
      %v1072 = vpop.f32.mrf.mxu0
      %v1073 = vadd.f32 0.0, %v1072
      %v1074 = vpop.f32.mrf.mxu0
      %v1075 = vpop.f32.mrf.mxu0
      %v1076 = vadd.f32 0.0, %v1075
      %v1077 = vpop.f32.mrf.mxu0
      %1078 = vmatprep.mubr.bf16.mxu0 %v899
      %1079 = vmatmul.mubr.bf16.gmra.mxu0 %v735
      %v1080 = vpop.f32.mrf.mxu0
      %v1081 = vadd.f32 0.0, %v1080
      %v1082 = vpop.f32.mrf.mxu0
      %v1083 = vpop.f32.mrf.mxu0
      %v1084 = vadd.f32 0.0, %v1083
      %v1085 = vpop.f32.mrf.mxu0
      %1086 = vmatprep.mubr.bf16.mxu0 %v902
      %1087 = vmatmul.mubr.bf16.gmra.mxu0 %v737
      %v1088 = vpop.f32.mrf.mxu0
      %v1089 = vadd.f32 0.0, %v1088
      %v1090 = vpop.f32.mrf.mxu0
      %v1091 = vpop.f32.mrf.mxu0
      %v1092 = vadd.f32 0.0, %v1091
      %v1093 = vpop.f32.mrf.mxu0
      %1094 = vmatprep.mubr.bf16.mxu0 %v905
      %1095 = vmatmul.mubr.bf16.gmra.mxu0 %v739
      %v1096 = vpop.f32.mrf.mxu0
      %v1097 = vadd.f32 0.0, %v1096
      %v1098 = vpop.f32.mrf.mxu0
      %v1099 = vpop.f32.mrf.mxu0
      %v1100 = vadd.f32 0.0, %v1099
      %v1101 = vpop.f32.mrf.mxu0
      %1102 = vmatprep.mubr.bf16.mxu0 %v908
      %1103 = vmatmul.mubr.bf16.gmra.mxu0 %v741
      %v1104 = vpop.f32.mrf.mxu0
      %v1105 = vadd.f32 0.0, %v1104
      %v1106 = vpop.f32.mrf.mxu0
      %v1107 = vpop.f32.mrf.mxu0
      %v1108 = vadd.f32 0.0, %v1107
      %v1109 = vpop.f32.mrf.mxu0
      %1110 = vmatprep.mubr.bf16.mxu0 %v911
      %1111 = vmatmul.mubr.bf16.gmra.mxu0 %v743
      %v1112 = vpop.f32.mrf.mxu0
      %v1113 = vadd.f32 0.0, %v1112
      %v1114 = vpop.f32.mrf.mxu0
      %v1115 = vpop.f32.mrf.mxu0
      %v1116 = vadd.f32 0.0, %v1115
      %v1117 = vpop.f32.mrf.mxu0
      %1118 = vmatprep.mubr.bf16.mxu0 %v914
      %1119 = vmatmul.mubr.bf16.gmra.mxu0 %v745
      %v1120 = vpop.f32.mrf.mxu0
      %v1121 = vadd.f32 0.0, %v1120
      %v1122 = vpop.f32.mrf.mxu0
      %v1123 = vpop.f32.mrf.mxu0
      %v1124 = vadd.f32 0.0, %v1123
      %v1125 = vpop.f32.mrf.mxu0
      %1126 = vmatprep.mubr.bf16.mxu0 %v917
      %1127 = vmatmul.mubr.bf16.gmra.mxu0 %v747
      %v1128 = vpop.f32.mrf.mxu0
      %v1129 = vadd.f32 0.0, %v1128
      %v1130 = vpop.f32.mrf.mxu0
      %v1131 = vpop.f32.mrf.mxu0
      %v1132 = vadd.f32 0.0, %v1131
      %v1133 = vpop.f32.mrf.mxu0
      %1134 = vmatprep.mubr.bf16.mxu0 %v920
      %1135 = vmatmul.mubr.bf16.gmra.mxu0 %v749
      %v1136 = vpop.f32.mrf.mxu0
      %v1137 = vadd.f32 0.0, %v1136
      %v1138 = vpop.f32.mrf.mxu0
      %v1139 = vpop.f32.mrf.mxu0
      %v1140 = vadd.f32 0.0, %v1139
      %v1141 = vpop.f32.mrf.mxu0
      %1142 = vmatprep.mubr.bf16.mxu0 %v923
      %1143 = vmatmul.mubr.bf16.gmra.mxu0 %v751
      %v1144 = vpop.f32.mrf.mxu0
      %v1145 = vadd.f32 0.0, %v1144
      %v1146 = vpop.f32.mrf.mxu0
      %v1147 = vpop.f32.mrf.mxu0
      %v1148 = vadd.f32 0.0, %v1147
      %v1149 = vpop.f32.mrf.mxu0
      %1150 = vmatprep.mubr.bf16.mxu0 %v926
      %1151 = vmatmul.mubr.bf16.gmra.mxu0 %v753
      %v1152 = vpop.f32.mrf.mxu0
      %v1153 = vadd.f32 0.0, %v1152
      %v1154 = vpop.f32.mrf.mxu0
      %v1155 = vpop.f32.mrf.mxu0
      %v1156 = vadd.f32 0.0, %v1155
      %v1157 = vpop.f32.mrf.mxu0
      %1158 = vmatprep.mubr.bf16.mxu0 %v929
      %1159 = vmatmul.mubr.bf16.gmra.mxu0 %v755
      %v1160 = vpop.f32.mrf.mxu0
      %v1161 = vadd.f32 0.0, %v1160
      %v1162 = vpop.f32.mrf.mxu0
      %v1163 = vpop.f32.mrf.mxu0
      %v1164 = vadd.f32 0.0, %v1163
      %v1165 = vpop.f32.mrf.mxu0
      %1166 = vmatprep.mubr.bf16.mxu0 %v932
      %1167 = vmatmul.mubr.bf16.gmra.mxu0 %v757
      %v1168 = vpop.f32.mrf.mxu0
      %v1169 = vadd.f32 0.0, %v1168
      %v1170 = vpop.f32.mrf.mxu0
      %v1171 = vpop.f32.mrf.mxu0
      %v1172 = vadd.f32 0.0, %v1171
      %v1173 = vpop.f32.mrf.mxu0
      %1174 = vmatprep.mubr.bf16.mxu0 %v935
      %1175 = vmatmul.mubr.bf16.gmra.mxu0 %v759
      %v1176 = vpop.f32.mrf.mxu0
      %v1177 = vadd.f32 0.0, %v1176
      %v1178 = vpop.f32.mrf.mxu0
      %v1179 = vpop.f32.mrf.mxu0
      %v1180 = vadd.f32 0.0, %v1179
      %v1181 = vpop.f32.mrf.mxu0
      %1182 = vmatprep.mubr.bf16.mxu0 %v938
      %1183 = vmatmul.mubr.bf16.gmra.mxu0 %v761
      %v1184 = vpop.f32.mrf.mxu0
      %v1185 = vadd.f32 0.0, %v1184
      %v1186 = vpop.f32.mrf.mxu0
      %v1187 = vpop.f32.mrf.mxu0
      %v1188 = vadd.f32 0.0, %v1187
      %v1189 = vpop.f32.mrf.mxu0
      %1190 = vmatprep.mubr.bf16.mxu0 %v941
      %1191 = vmatmul.mubr.bf16.gmra.mxu0 %v763
      %v1192 = vpop.f32.mrf.mxu0
      %v1193 = vadd.f32 0.0, %v1192
      %v1194 = vpop.f32.mrf.mxu0
      %v1195 = vpop.f32.mrf.mxu0
      %v1196 = vadd.f32 0.0, %v1195
      %v1197 = vpop.f32.mrf.mxu0
      %1198 = vmatprep.mubr.bf16.mxu0 %v944
      %1199 = vmatmul.mubr.bf16.gmra.mxu0 %v765
      %v1200 = vpop.f32.mrf.mxu0
      %v1201 = vadd.f32 0.0, %v1200
      %v1202 = vpop.f32.mrf.mxu0
      %v1203 = vpop.f32.mrf.mxu0
      %v1204 = vadd.f32 0.0, %v1203
      %v1205 = vpop.f32.mrf.mxu0
      %1206 = vmatprep.mubr.bf16.mxu0 %v947
      %1207 = vmatmul.mubr.bf16.gmra.mxu0 %v767
      %v1208 = vpop.f32.mrf.mxu0
      %v1209 = vadd.f32 0.0, %v1208
      %v1210 = vpop.f32.mrf.mxu0
      %v1211 = vpop.f32.mrf.mxu0
      %v1212 = vadd.f32 0.0, %v1211
      %v1213 = vpop.f32.mrf.mxu0
      %1214 = vmatprep.mubr.bf16.mxu0 %v950
      %1215 = vmatmul.mubr.bf16.gmra.mxu0 %v769
      %v1216 = vpop.f32.mrf.mxu0
      %v1217 = vadd.f32 0.0, %v1216
      %v1218 = vpop.f32.mrf.mxu0
      %v1219 = vpop.f32.mrf.mxu0
      %v1220 = vadd.f32 0.0, %v1219
      %v1221 = vpop.f32.mrf.mxu0
      %1222 = vmatprep.mubr.bf16.mxu0 %v953
      %1223 = vmatmul.mubr.bf16.gmra.mxu0 %v771
      %v1224 = vpop.f32.mrf.mxu0
      %v1225 = vadd.f32 0.0, %v1224
      %v1226 = vpop.f32.mrf.mxu0
      %v1227 = vpop.f32.mrf.mxu0
      %v1228 = vadd.f32 0.0, %v1227
      %v1229 = vpop.f32.mrf.mxu0
      %1230 = vmatprep.mubr.bf16.mxu0 %v956
      %1231 = vmatmul.mubr.bf16.gmra.mxu0 %v773
      %v1232 = vpop.f32.mrf.mxu0
      %v1233 = vadd.f32 0.0, %v1232
      %v1234 = vpop.f32.mrf.mxu0
      %v1235 = vpop.f32.mrf.mxu0
      %v1236 = vadd.f32 0.0, %v1235
      %v1237 = vpop.f32.mrf.mxu0
      %1238 = vmatprep.mubr.bf16.mxu0 %v959
      %1239 = vmatmul.mubr.bf16.gmra.mxu0 %v775
      %v1240 = vpop.f32.mrf.mxu0
      %v1241 = vadd.f32 0.0, %v1240
      %v1242 = vpop.f32.mrf.mxu0
      %v1243 = vpop.f32.mrf.mxu0
      %v1244 = vadd.f32 0.0, %v1243
      %v1245 = vpop.f32.mrf.mxu0
      %1246 = vmatprep.mubr.bf16.mxu0 %v962
      %1247 = vmatmul.mubr.bf16.gmra.mxu0 %v777
      %v1248 = vpop.f32.mrf.mxu0
      %v1249 = vadd.f32 0.0, %v1248
      %v1250 = vpop.f32.mrf.mxu0
      %v1251 = vpop.f32.mrf.mxu0
      %v1252 = vadd.f32 0.0, %v1251
      %v1253 = vpop.f32.mrf.mxu0
      %1254 = vmatprep.mubr.bf16.mxu0 %v965
      %1255 = vmatmul.mubr.bf16.gmra.mxu0 %v779
      %v1256 = vpop.f32.mrf.mxu0
      %v1257 = vadd.f32 0.0, %v1256
      %v1258 = vpop.f32.mrf.mxu0
      %v1259 = vpop.f32.mrf.mxu0
      %v1260 = vadd.f32 0.0, %v1259
      %v1261 = vpop.f32.mrf.mxu0
      %1262 = vdwg.mxu0
      %v1263 = vadd.f32 %v442, %v1009
      %v1264 = vadd.f32 %v443, %v1012
      %v1265 = vadd.f32 %v444, %v1017
      %v1266 = vadd.f32 %v445, %v1020
      %v1267 = vadd.f32 %v446, %v1025
      %v1268 = vadd.f32 %v447, %v1028
      %v1269 = vadd.f32 %v448, %v1033
      %v1270 = vadd.f32 %v449, %v1036
      %v1271 = vadd.f32 %v450, %v1041
      %v1272 = vadd.f32 %v451, %v1044
      %v1273 = vadd.f32 %v452, %v1049
      %v1274 = vadd.f32 %v453, %v1052
      %v1275 = vadd.f32 %v454, %v1057
      %v1276 = vadd.f32 %v455, %v1060
      %v1277 = vadd.f32 %v456, %v1065
      %v1278 = vadd.f32 %v457, %v1068
      %v1279 = vadd.f32 %v458, %v1073
      %v1280 = vadd.f32 %v459, %v1076
      %v1281 = vadd.f32 %v460, %v1081
      %v1282 = vadd.f32 %v461, %v1084
      %v1283 = vadd.f32 %v462, %v1089
      %v1284 = vadd.f32 %v463, %v1092
      %v1285 = vadd.f32 %v464, %v1097
      %v1286 = vadd.f32 %v465, %v1100
      %v1287 = vadd.f32 %v466, %v1105
      %v1288 = vadd.f32 %v467, %v1108
      %v1289 = vadd.f32 %v468, %v1113
      %v1290 = vadd.f32 %v469, %v1116
      %v1291 = vadd.f32 %v470, %v1121
      %v1292 = vadd.f32 %v471, %v1124
      %v1293 = vadd.f32 %v472, %v1129
      %v1294 = vadd.f32 %v473, %v1132
      %v1295 = vadd.f32 %v474, %v1137
      %v1296 = vadd.f32 %v475, %v1140
      %v1297 = vadd.f32 %v476, %v1145
      %v1298 = vadd.f32 %v477, %v1148
      %v1299 = vadd.f32 %v478, %v1153
      %v1300 = vadd.f32 %v479, %v1156
      %v1301 = vadd.f32 %v480, %v1161
      %v1302 = vadd.f32 %v481, %v1164
      %v1303 = vadd.f32 %v482, %v1169
      %v1304 = vadd.f32 %v483, %v1172
      %v1305 = vadd.f32 %v484, %v1177
      %v1306 = vadd.f32 %v485, %v1180
      %v1307 = vadd.f32 %v486, %v1185
      %v1308 = vadd.f32 %v487, %v1188
      %v1309 = vadd.f32 %v488, %v1193
      %v1310 = vadd.f32 %v489, %v1196
      %v1311 = vadd.f32 %v490, %v1201
      %v1312 = vadd.f32 %v491, %v1204
      %v1313 = vadd.f32 %v492, %v1209
      %v1314 = vadd.f32 %v493, %v1212
      %v1315 = vadd.f32 %v494, %v1217
      %v1316 = vadd.f32 %v495, %v1220
      %v1317 = vadd.f32 %v496, %v1225
      %v1318 = vadd.f32 %v497, %v1228
      %v1319 = vadd.f32 %v498, %v1233
      %v1320 = vadd.f32 %v499, %v1236
      %v1321 = vadd.f32 %v500, %v1241
      %v1322 = vadd.f32 %v501, %v1244
      %v1323 = vadd.f32 %v502, %v1249
      %v1324 = vadd.f32 %v503, %v1252
      %v1325 = vadd.f32 %v504, %v1257
      %v1326 = vadd.f32 %v505, %v1260
      %vm1327 = vcmask 523264
      %1328 = vst.msk [vmem:[#allocation2] sm:$0xff] %vm1327, %v1263
      %1329 = vst.msk [vmem:[#allocation2 + $0x8] sm:$0xff] %vm1327, %v1264
      %1330 = vst.msk [vmem:[#allocation2 + $0x10] sm:$0xff] %vm1327, %v1265
      %1331 = vst.msk [vmem:[#allocation2 + $0x18] sm:$0xff] %vm1327, %v1266
      %1332 = vst.msk [vmem:[#allocation2 + $0x20] sm:$0xff] %vm1327, %v1267
      %1333 = vst.msk [vmem:[#allocation2 + $0x28] sm:$0xff] %vm1327, %v1268
      %1334 = vst.msk [vmem:[#allocation2 + $0x30] sm:$0xff] %vm1327, %v1269
      %1335 = vst.msk [vmem:[#allocation2 + $0x38] sm:$0xff] %vm1327, %v1270
      %1336 = vst.msk [vmem:[#allocation2 + $0x40] sm:$0xff] %vm1327, %v1271
      %1337 = vst.msk [vmem:[#allocation2 + $0x48] sm:$0xff] %vm1327, %v1272
      %1338 = vst.msk [vmem:[#allocation2 + $0x50] sm:$0xff] %vm1327, %v1273
      %1339 = vst.msk [vmem:[#allocation2 + $0x58] sm:$0xff] %vm1327, %v1274
      %1340 = vst.msk [vmem:[#allocation2 + $0x60] sm:$0xff] %vm1327, %v1275
      %1341 = vst.msk [vmem:[#allocation2 + $0x68] sm:$0xff] %vm1327, %v1276
      %1342 = vst.msk [vmem:[#allocation2 + $0x70] sm:$0xff] %vm1327, %v1277
      %1343 = vst.msk [vmem:[#allocation2 + $0x78] sm:$0xff] %vm1327, %v1278
      %1344 = vst.msk [vmem:[#allocation2 + $0x80] sm:$0xff] %vm1327, %v1279
      %1345 = vst.msk [vmem:[#allocation2 + $0x88] sm:$0xff] %vm1327, %v1280
      %1346 = vst.msk [vmem:[#allocation2 + $0x90] sm:$0xff] %vm1327, %v1281
      %1347 = vst.msk [vmem:[#allocation2 + $0x98] sm:$0xff] %vm1327, %v1282
      %1348 = vst.msk [vmem:[#allocation2 + $0xa0] sm:$0xff] %vm1327, %v1283
      %1349 = vst.msk [vmem:[#allocation2 + $0xa8] sm:$0xff] %vm1327, %v1284
      %1350 = vst.msk [vmem:[#allocation2 + $0xb0] sm:$0xff] %vm1327, %v1285
      %1351 = vst.msk [vmem:[#allocation2 + $0xb8] sm:$0xff] %vm1327, %v1286
      %1352 = vst.msk [vmem:[#allocation2 + $0xc0] sm:$0xff] %vm1327, %v1287
      %1353 = vst.msk [vmem:[#allocation2 + $0xc8] sm:$0xff] %vm1327, %v1288
      %1354 = vst.msk [vmem:[#allocation2 + $0xd0] sm:$0xff] %vm1327, %v1289
      %1355 = vst.msk [vmem:[#allocation2 + $0xd8] sm:$0xff] %vm1327, %v1290
      %1356 = vst.msk [vmem:[#allocation2 + $0xe0] sm:$0xff] %vm1327, %v1291
      %1357 = vst.msk [vmem:[#allocation2 + $0xe8] sm:$0xff] %vm1327, %v1292
      %1358 = vst.msk [vmem:[#allocation2 + $0xf0] sm:$0xff] %vm1327, %v1293
      %1359 = vst.msk [vmem:[#allocation2 + $0xf8] sm:$0xff] %vm1327, %v1294
      %1360 = vst.msk [vmem:[#allocation2 + $0x100] sm:$0xff] %vm1327, %v1295
      %1361 = vst.msk [vmem:[#allocation2 + $0x108] sm:$0xff] %vm1327, %v1296
      %1362 = vst.msk [vmem:[#allocation2 + $0x110] sm:$0xff] %vm1327, %v1297
      %1363 = vst.msk [vmem:[#allocation2 + $0x118] sm:$0xff] %vm1327, %v1298
      %1364 = vst.msk [vmem:[#allocation2 + $0x120] sm:$0xff] %vm1327, %v1299
      %1365 = vst.msk [vmem:[#allocation2 + $0x128] sm:$0xff] %vm1327, %v1300
      %1366 = vst.msk [vmem:[#allocation2 + $0x130] sm:$0xff] %vm1327, %v1301
      %1367 = vst.msk [vmem:[#allocation2 + $0x138] sm:$0xff] %vm1327, %v1302
      %1368 = vst.msk [vmem:[#allocation2 + $0x140] sm:$0xff] %vm1327, %v1303
      %1369 = vst.msk [vmem:[#allocation2 + $0x148] sm:$0xff] %vm1327, %v1304
      %1370 = vst.msk [vmem:[#allocation2 + $0x150] sm:$0xff] %vm1327, %v1305
      %1371 = vst.msk [vmem:[#allocation2 + $0x158] sm:$0xff] %vm1327, %v1306
      %1372 = vst.msk [vmem:[#allocation2 + $0x160] sm:$0xff] %vm1327, %v1307
      %1373 = vst.msk [vmem:[#allocation2 + $0x168] sm:$0xff] %vm1327, %v1308
      %1374 = vst.msk [vmem:[#allocation2 + $0x170] sm:$0xff] %vm1327, %v1309
      %1375 = vst.msk [vmem:[#allocation2 + $0x178] sm:$0xff] %vm1327, %v1310
      %1376 = vst.msk [vmem:[#allocation2 + $0x180] sm:$0xff] %vm1327, %v1311
      %1377 = vst.msk [vmem:[#allocation2 + $0x188] sm:$0xff] %vm1327, %v1312
      %1378 = vst.msk [vmem:[#allocation2 + $0x190] sm:$0xff] %vm1327, %v1313
      %1379 = vst.msk [vmem:[#allocation2 + $0x198] sm:$0xff] %vm1327, %v1314
      %1380 = vst.msk [vmem:[#allocation2 + $0x1a0] sm:$0xff] %vm1327, %v1315
      %1381 = vst.msk [vmem:[#allocation2 + $0x1a8] sm:$0xff] %vm1327, %v1316
      %1382 = vst.msk [vmem:[#allocation2 + $0x1b0] sm:$0xff] %vm1327, %v1317
      %1383 = vst.msk [vmem:[#allocation2 + $0x1b8] sm:$0xff] %vm1327, %v1318
      %1384 = vst.msk [vmem:[#allocation2 + $0x1c0] sm:$0xff] %vm1327, %v1319
      %1385 = vst.msk [vmem:[#allocation2 + $0x1c8] sm:$0xff] %vm1327, %v1320
      %1386 = vst.msk [vmem:[#allocation2 + $0x1d0] sm:$0xff] %vm1327, %v1321
      %1387 = vst.msk [vmem:[#allocation2 + $0x1d8] sm:$0xff] %vm1327, %v1322
      %1388 = vst.msk [vmem:[#allocation2 + $0x1e0] sm:$0xff] %vm1327, %v1323
      %1389 = vst.msk [vmem:[#allocation2 + $0x1e8] sm:$0xff] %vm1327, %v1324
      %1390 = vst.msk [vmem:[#allocation2 + $0x1f0] sm:$0xff] %vm1327, %v1325
      %1391 = vst.msk [vmem:[#allocation2 + $0x1f8] sm:$0xff] %vm1327, %v1326
      // Predicated region
      $region41: #{stem_conv.1} parent=35 // pred_check
        %p1392 = pneg %p309
      $region42: #{stem_conv.1} parent=35 // pred_check_branch
        %1394 = sbr.rel (%p1392) target = $region44
      $region43: #{stem_conv.1} parent=35 // pred_region
        %v1395 = vld [vmem:[#allocation2] sm:$0xff]
        %v1396 = vld [vmem:[#allocation2 + $0x8] sm:$0xff]
        %v1397 = vld [vmem:[#allocation2 + $0x10] sm:$0xff]
        %v1398 = vld [vmem:[#allocation2 + $0x18] sm:$0xff]
        %v1399 = vld [vmem:[#allocation2 + $0x20] sm:$0xff]
        %v1400 = vld [vmem:[#allocation2 + $0x28] sm:$0xff]
        %v1401 = vld [vmem:[#allocation2 + $0x30] sm:$0xff]
        %v1402 = vld [vmem:[#allocation2 + $0x38] sm:$0xff]
        %v1403 = vld [vmem:[#allocation2 + $0x40] sm:$0xff]
        %v1404 = vld [vmem:[#allocation2 + $0x48] sm:$0xff]
        %v1405 = vld [vmem:[#allocation2 + $0x50] sm:$0xff]
        %v1406 = vld [vmem:[#allocation2 + $0x58] sm:$0xff]
        %v1407 = vld [vmem:[#allocation2 + $0x60] sm:$0xff]
        %v1408 = vld [vmem:[#allocation2 + $0x68] sm:$0xff]
        %v1409 = vld [vmem:[#allocation2 + $0x70] sm:$0xff]
        %v1410 = vld [vmem:[#allocation2 + $0x78] sm:$0xff]
        %v1411 = vld [vmem:[#allocation2 + $0x80] sm:$0xff]
        %v1412 = vld [vmem:[#allocation2 + $0x88] sm:$0xff]
        %v1413 = vld [vmem:[#allocation2 + $0x90] sm:$0xff]
        %v1414 = vld [vmem:[#allocation2 + $0x98] sm:$0xff]
        %v1415 = vld [vmem:[#allocation2 + $0xa0] sm:$0xff]
        %v1416 = vld [vmem:[#allocation2 + $0xa8] sm:$0xff]
        %v1417 = vld [vmem:[#allocation2 + $0xb0] sm:$0xff]
        %v1418 = vld [vmem:[#allocation2 + $0xb8] sm:$0xff]
        %v1419 = vld [vmem:[#allocation2 + $0xc0] sm:$0xff]
        %v1420 = vld [vmem:[#allocation2 + $0xc8] sm:$0xff]
        %v1421 = vld [vmem:[#allocation2 + $0xd0] sm:$0xff]
        %v1422 = vld [vmem:[#allocation2 + $0xd8] sm:$0xff]
        %v1423 = vld [vmem:[#allocation2 + $0xe0] sm:$0xff]
        %v1424 = vld [vmem:[#allocation2 + $0xe8] sm:$0xff]
        %v1425 = vld [vmem:[#allocation2 + $0xf0] sm:$0xff]
        %v1426 = vld [vmem:[#allocation2 + $0xf8] sm:$0xff]
        %v1427 = vld [vmem:[#allocation2 + $0x100] sm:$0xff]
        %v1428 = vld [vmem:[#allocation2 + $0x108] sm:$0xff]
        %v1429 = vld [vmem:[#allocation2 + $0x110] sm:$0xff]
        %v1430 = vld [vmem:[#allocation2 + $0x118] sm:$0xff]
        %v1431 = vld [vmem:[#allocation2 + $0x120] sm:$0xff]
        %v1432 = vld [vmem:[#allocation2 + $0x128] sm:$0xff]
        %v1433 = vld [vmem:[#allocation2 + $0x130] sm:$0xff]
        %v1434 = vld [vmem:[#allocation2 + $0x138] sm:$0xff]
        %v1435 = vld [vmem:[#allocation2 + $0x140] sm:$0xff]
        %v1436 = vld [vmem:[#allocation2 + $0x148] sm:$0xff]
        %v1437 = vld [vmem:[#allocation2 + $0x150] sm:$0xff]
        %v1438 = vld [vmem:[#allocation2 + $0x158] sm:$0xff]
        %v1439 = vld [vmem:[#allocation2 + $0x160] sm:$0xff]
        %v1440 = vld [vmem:[#allocation2 + $0x168] sm:$0xff]
        %v1441 = vld [vmem:[#allocation2 + $0x170] sm:$0xff]
        %v1442 = vld [vmem:[#allocation2 + $0x178] sm:$0xff]
        %v1443 = vld [vmem:[#allocation2 + $0x180] sm:$0xff]
        %v1444 = vld [vmem:[#allocation2 + $0x188] sm:$0xff]
        %v1445 = vld [vmem:[#allocation2 + $0x190] sm:$0xff]
        %v1446 = vld [vmem:[#allocation2 + $0x198] sm:$0xff]
        %v1447 = vld [vmem:[#allocation2 + $0x1a0] sm:$0xff]
        %v1448 = vld [vmem:[#allocation2 + $0x1a8] sm:$0xff]
        %v1449 = vld [vmem:[#allocation2 + $0x1b0] sm:$0xff]
        %v1450 = vld [vmem:[#allocation2 + $0x1b8] sm:$0xff]
        %v1451 = vld [vmem:[#allocation2 + $0x1c0] sm:$0xff]
        %v1452 = vld [vmem:[#allocation2 + $0x1c8] sm:$0xff]
        %v1453 = vld [vmem:[#allocation2 + $0x1d0] sm:$0xff]
        %v1454 = vld [vmem:[#allocation2 + $0x1d8] sm:$0xff]
        %v1455 = vld [vmem:[#allocation2 + $0x1e0] sm:$0xff]
        %v1456 = vld [vmem:[#allocation2 + $0x1e8] sm:$0xff]
        %v1457 = vld [vmem:[#allocation2 + $0x1f0] sm:$0xff]
        %v1458 = vld [vmem:[#allocation2 + $0x1f8] sm:$0xff]
        %v1459 = vld [vmem:[%s295] sm:$0x1]
        %v1461 = vlaneseq
        %v1462 = vshrl.u32 %v1461, 7
        %v1463 = vsub.s32 0, %v1462
        %v1464 = vrot.slane %v1459, %v1463
        %v1466 = vmul.f32 %v1395, %v1464
        %v1467 = vmul.f32 %v1396, %v1464
        %v1468 = vmul.f32 %v1397, %v1464
        %v1469 = vmul.f32 %v1398, %v1464
        %v1470 = vmul.f32 %v1399, %v1464
        %v1471 = vmul.f32 %v1400, %v1464
        %v1472 = vmul.f32 %v1401, %v1464
        %v1473 = vmul.f32 %v1402, %v1464
        %v1474 = vmul.f32 %v1403, %v1464
        %v1475 = vmul.f32 %v1404, %v1464
        %v1476 = vmul.f32 %v1405, %v1464
        %v1477 = vmul.f32 %v1406, %v1464
        %v1478 = vmul.f32 %v1407, %v1464
        %v1479 = vmul.f32 %v1408, %v1464
        %v1480 = vmul.f32 %v1409, %v1464
        %v1481 = vmul.f32 %v1410, %v1464
        %v1482 = vmul.f32 %v1411, %v1464
        %v1483 = vmul.f32 %v1412, %v1464
        %v1484 = vmul.f32 %v1413, %v1464
        %v1485 = vmul.f32 %v1414, %v1464
        %v1486 = vmul.f32 %v1415, %v1464
        %v1487 = vmul.f32 %v1416, %v1464
        %v1488 = vmul.f32 %v1417, %v1464
        %v1489 = vmul.f32 %v1418, %v1464
        %v1490 = vmul.f32 %v1419, %v1464
        %v1491 = vmul.f32 %v1420, %v1464
        %v1492 = vmul.f32 %v1421, %v1464
        %v1493 = vmul.f32 %v1422, %v1464
        %v1494 = vmul.f32 %v1423, %v1464
        %v1495 = vmul.f32 %v1424, %v1464
        %v1496 = vmul.f32 %v1425, %v1464
        %v1497 = vmul.f32 %v1426, %v1464
        %v1498 = vmul.f32 %v1427, %v1464
        %v1499 = vmul.f32 %v1428, %v1464
        %v1500 = vmul.f32 %v1429, %v1464
        %v1501 = vmul.f32 %v1430, %v1464
        %v1502 = vmul.f32 %v1431, %v1464
        %v1503 = vmul.f32 %v1432, %v1464
        %v1504 = vmul.f32 %v1433, %v1464
        %v1505 = vmul.f32 %v1434, %v1464
        %v1506 = vmul.f32 %v1435, %v1464
        %v1507 = vmul.f32 %v1436, %v1464
        %v1508 = vmul.f32 %v1437, %v1464
        %v1509 = vmul.f32 %v1438, %v1464
        %v1510 = vmul.f32 %v1439, %v1464
        %v1511 = vmul.f32 %v1440, %v1464
        %v1512 = vmul.f32 %v1441, %v1464
        %v1513 = vmul.f32 %v1442, %v1464
        %v1514 = vmul.f32 %v1443, %v1464
        %v1515 = vmul.f32 %v1444, %v1464
        %v1516 = vmul.f32 %v1445, %v1464
        %v1517 = vmul.f32 %v1446, %v1464
        %v1518 = vmul.f32 %v1447, %v1464
        %v1519 = vmul.f32 %v1448, %v1464
        %v1520 = vmul.f32 %v1449, %v1464
        %v1521 = vmul.f32 %v1450, %v1464
        %v1522 = vmul.f32 %v1451, %v1464
        %v1523 = vmul.f32 %v1452, %v1464
        %v1524 = vmul.f32 %v1453, %v1464
        %v1525 = vmul.f32 %v1454, %v1464
        %v1526 = vmul.f32 %v1455, %v1464
        %v1527 = vmul.f32 %v1456, %v1464
        %v1528 = vmul.f32 %v1457, %v1464
        %v1529 = vmul.f32 %v1458, %v1464
        %v1530 = vld [vmem:[%s298] sm:$0x1]
        %v1532 = vlaneseq
        %v1533 = vshrl.u32 %v1532, 7
        %v1534 = vsub.s32 0, %v1533
        %v1535 = vrot.slane %v1530, %v1534
        %v1537 = vadd.f32 %v1466, %v1535
        %v1538 = vadd.f32 %v1467, %v1535
        %v1539 = vadd.f32 %v1468, %v1535
        %v1540 = vadd.f32 %v1469, %v1535
        %v1541 = vadd.f32 %v1470, %v1535
        %v1542 = vadd.f32 %v1471, %v1535
        %v1543 = vadd.f32 %v1472, %v1535
        %v1544 = vadd.f32 %v1473, %v1535
        %v1545 = vadd.f32 %v1474, %v1535
        %v1546 = vadd.f32 %v1475, %v1535
        %v1547 = vadd.f32 %v1476, %v1535
        %v1548 = vadd.f32 %v1477, %v1535
        %v1549 = vadd.f32 %v1478, %v1535
        %v1550 = vadd.f32 %v1479, %v1535
        %v1551 = vadd.f32 %v1480, %v1535
        %v1552 = vadd.f32 %v1481, %v1535
        %v1553 = vadd.f32 %v1482, %v1535
        %v1554 = vadd.f32 %v1483, %v1535
        %v1555 = vadd.f32 %v1484, %v1535
        %v1556 = vadd.f32 %v1485, %v1535
        %v1557 = vadd.f32 %v1486, %v1535
        %v1558 = vadd.f32 %v1487, %v1535
        %v1559 = vadd.f32 %v1488, %v1535
        %v1560 = vadd.f32 %v1489, %v1535
        %v1561 = vadd.f32 %v1490, %v1535
        %v1562 = vadd.f32 %v1491, %v1535
        %v1563 = vadd.f32 %v1492, %v1535
        %v1564 = vadd.f32 %v1493, %v1535
        %v1565 = vadd.f32 %v1494, %v1535
        %v1566 = vadd.f32 %v1495, %v1535
        %v1567 = vadd.f32 %v1496, %v1535
        %v1568 = vadd.f32 %v1497, %v1535
        %v1569 = vadd.f32 %v1498, %v1535
        %v1570 = vadd.f32 %v1499, %v1535
        %v1571 = vadd.f32 %v1500, %v1535
        %v1572 = vadd.f32 %v1501, %v1535
        %v1573 = vadd.f32 %v1502, %v1535
        %v1574 = vadd.f32 %v1503, %v1535
        %v1575 = vadd.f32 %v1504, %v1535
        %v1576 = vadd.f32 %v1505, %v1535
        %v1577 = vadd.f32 %v1506, %v1535
        %v1578 = vadd.f32 %v1507, %v1535
        %v1579 = vadd.f32 %v1508, %v1535
        %v1580 = vadd.f32 %v1509, %v1535
        %v1581 = vadd.f32 %v1510, %v1535
        %v1582 = vadd.f32 %v1511, %v1535
        %v1583 = vadd.f32 %v1512, %v1535
        %v1584 = vadd.f32 %v1513, %v1535
        %v1585 = vadd.f32 %v1514, %v1535
        %v1586 = vadd.f32 %v1515, %v1535
        %v1587 = vadd.f32 %v1516, %v1535
        %v1588 = vadd.f32 %v1517, %v1535
        %v1589 = vadd.f32 %v1518, %v1535
        %v1590 = vadd.f32 %v1519, %v1535
        %v1591 = vadd.f32 %v1520, %v1535
        %v1592 = vadd.f32 %v1521, %v1535
        %v1593 = vadd.f32 %v1522, %v1535
        %v1594 = vadd.f32 %v1523, %v1535
        %v1595 = vadd.f32 %v1524, %v1535
        %v1596 = vadd.f32 %v1525, %v1535
        %v1597 = vadd.f32 %v1526, %v1535
        %v1598 = vadd.f32 %v1527, %v1535
        %v1599 = vadd.f32 %v1528, %v1535
        %v1600 = vadd.f32 %v1529, %v1535
        %v1601 = vmax.f32 %v1537, 0.0
        %v1602 = vmax.f32 %v1538, 0.0
        %v1603 = vmax.f32 %v1539, 0.0
        %v1604 = vmax.f32 %v1540, 0.0
        %v1605 = vmax.f32 %v1541, 0.0
        %v1606 = vmax.f32 %v1542, 0.0
        %v1607 = vmax.f32 %v1543, 0.0
        %v1608 = vmax.f32 %v1544, 0.0
        %v1609 = vmax.f32 %v1545, 0.0
        %v1610 = vmax.f32 %v1546, 0.0
        %v1611 = vmax.f32 %v1547, 0.0
        %v1612 = vmax.f32 %v1548, 0.0
        %v1613 = vmax.f32 %v1549, 0.0
        %v1614 = vmax.f32 %v1550, 0.0
        %v1615 = vmax.f32 %v1551, 0.0
        %v1616 = vmax.f32 %v1552, 0.0
        %v1617 = vmax.f32 %v1553, 0.0
        %v1618 = vmax.f32 %v1554, 0.0
        %v1619 = vmax.f32 %v1555, 0.0
        %v1620 = vmax.f32 %v1556, 0.0
        %v1621 = vmax.f32 %v1557, 0.0
        %v1622 = vmax.f32 %v1558, 0.0
        %v1623 = vmax.f32 %v1559, 0.0
        %v1624 = vmax.f32 %v1560, 0.0
        %v1625 = vmax.f32 %v1561, 0.0
        %v1626 = vmax.f32 %v1562, 0.0
        %v1627 = vmax.f32 %v1563, 0.0
        %v1628 = vmax.f32 %v1564, 0.0
        %v1629 = vmax.f32 %v1565, 0.0
        %v1630 = vmax.f32 %v1566, 0.0
        %v1631 = vmax.f32 %v1567, 0.0
        %v1632 = vmax.f32 %v1568, 0.0
        %v1633 = vmax.f32 %v1569, 0.0
        %v1634 = vmax.f32 %v1570, 0.0
        %v1635 = vmax.f32 %v1571, 0.0
        %v1636 = vmax.f32 %v1572, 0.0
        %v1637 = vmax.f32 %v1573, 0.0
        %v1638 = vmax.f32 %v1574, 0.0
        %v1639 = vmax.f32 %v1575, 0.0
        %v1640 = vmax.f32 %v1576, 0.0
        %v1641 = vmax.f32 %v1577, 0.0
        %v1642 = vmax.f32 %v1578, 0.0
        %v1643 = vmax.f32 %v1579, 0.0
        %v1644 = vmax.f32 %v1580, 0.0
        %v1645 = vmax.f32 %v1581, 0.0
        %v1646 = vmax.f32 %v1582, 0.0
        %v1647 = vmax.f32 %v1583, 0.0
        %v1648 = vmax.f32 %v1584, 0.0
        %v1649 = vmax.f32 %v1585, 0.0
        %v1650 = vmax.f32 %v1586, 0.0
        %v1651 = vmax.f32 %v1587, 0.0
        %v1652 = vmax.f32 %v1588, 0.0
        %v1653 = vmax.f32 %v1589, 0.0
        %v1654 = vmax.f32 %v1590, 0.0
        %v1655 = vmax.f32 %v1591, 0.0
        %v1656 = vmax.f32 %v1592, 0.0
        %v1657 = vmax.f32 %v1593, 0.0
        %v1658 = vmax.f32 %v1594, 0.0
        %v1659 = vmax.f32 %v1595, 0.0
        %v1660 = vmax.f32 %v1596, 0.0
        %v1661 = vmax.f32 %v1597, 0.0
        %v1662 = vmax.f32 %v1598, 0.0
        %v1663 = vmax.f32 %v1599, 0.0
        %v1664 = vmax.f32 %v1600, 0.0
        %1665 = vst.msk [vmem:[%s306] sm:$0xff] %vm1327, %v1601
        %1666 = vst.msk [vmem:[%s306 + $0x8] sm:$0xff] %vm1327, %v1602
        %1667 = vst.msk [vmem:[%s306 + $0x10] sm:$0xff] %vm1327, %v1603
        %1668 = vst.msk [vmem:[%s306 + $0x18] sm:$0xff] %vm1327, %v1604
        %1669 = vst.msk [vmem:[%s306 + $0x20] sm:$0xff] %vm1327, %v1605
        %1670 = vst.msk [vmem:[%s306 + $0x28] sm:$0xff] %vm1327, %v1606
        %1671 = vst.msk [vmem:[%s306 + $0x30] sm:$0xff] %vm1327, %v1607
        %1672 = vst.msk [vmem:[%s306 + $0x38] sm:$0xff] %vm1327, %v1608
        %1673 = vst.msk [vmem:[%s306 + $0x40] sm:$0xff] %vm1327, %v1609
        %1674 = vst.msk [vmem:[%s306 + $0x48] sm:$0xff] %vm1327, %v1610
        %1675 = vst.msk [vmem:[%s306 + $0x50] sm:$0xff] %vm1327, %v1611
        %1676 = vst.msk [vmem:[%s306 + $0x58] sm:$0xff] %vm1327, %v1612
        %1677 = vst.msk [vmem:[%s306 + $0x60] sm:$0xff] %vm1327, %v1613
        %1678 = vst.msk [vmem:[%s306 + $0x68] sm:$0xff] %vm1327, %v1614
        %1679 = vst.msk [vmem:[%s306 + $0x70] sm:$0xff] %vm1327, %v1615
        %1680 = vst.msk [vmem:[%s306 + $0x78] sm:$0xff] %vm1327, %v1616
        %1681 = vst.msk [vmem:[%s306 + $0x80] sm:$0xff] %vm1327, %v1617
        %1682 = vst.msk [vmem:[%s306 + $0x88] sm:$0xff] %vm1327, %v1618
        %1683 = vst.msk [vmem:[%s306 + $0x90] sm:$0xff] %vm1327, %v1619
        %1684 = vst.msk [vmem:[%s306 + $0x98] sm:$0xff] %vm1327, %v1620
        %1685 = vst.msk [vmem:[%s306 + $0xa0] sm:$0xff] %vm1327, %v1621
        %1686 = vst.msk [vmem:[%s306 + $0xa8] sm:$0xff] %vm1327, %v1622
        %1687 = vst.msk [vmem:[%s306 + $0xb0] sm:$0xff] %vm1327, %v1623
        %1688 = vst.msk [vmem:[%s306 + $0xb8] sm:$0xff] %vm1327, %v1624
        %1689 = vst.msk [vmem:[%s306 + $0xc0] sm:$0xff] %vm1327, %v1625
        %1690 = vst.msk [vmem:[%s306 + $0xc8] sm:$0xff] %vm1327, %v1626
        %1691 = vst.msk [vmem:[%s306 + $0xd0] sm:$0xff] %vm1327, %v1627
        %1692 = vst.msk [vmem:[%s306 + $0xd8] sm:$0xff] %vm1327, %v1628
        %1693 = vst.msk [vmem:[%s306 + $0xe0] sm:$0xff] %vm1327, %v1629
        %1694 = vst.msk [vmem:[%s306 + $0xe8] sm:$0xff] %vm1327, %v1630
        %1695 = vst.msk [vmem:[%s306 + $0xf0] sm:$0xff] %vm1327, %v1631
        %1696 = vst.msk [vmem:[%s306 + $0xf8] sm:$0xff] %vm1327, %v1632
        %1697 = vst.msk [vmem:[%s306 + $0x100] sm:$0xff] %vm1327, %v1633
        %1698 = vst.msk [vmem:[%s306 + $0x108] sm:$0xff] %vm1327, %v1634
        %1699 = vst.msk [vmem:[%s306 + $0x110] sm:$0xff] %vm1327, %v1635
        %1700 = vst.msk [vmem:[%s306 + $0x118] sm:$0xff] %vm1327, %v1636
        %1701 = vst.msk [vmem:[%s306 + $0x120] sm:$0xff] %vm1327, %v1637
        %1702 = vst.msk [vmem:[%s306 + $0x128] sm:$0xff] %vm1327, %v1638
        %1703 = vst.msk [vmem:[%s306 + $0x130] sm:$0xff] %vm1327, %v1639
        %1704 = vst.msk [vmem:[%s306 + $0x138] sm:$0xff] %vm1327, %v1640
        %1705 = vst.msk [vmem:[%s306 + $0x140] sm:$0xff] %vm1327, %v1641
        %1706 = vst.msk [vmem:[%s306 + $0x148] sm:$0xff] %vm1327, %v1642
        %1707 = vst.msk [vmem:[%s306 + $0x150] sm:$0xff] %vm1327, %v1643
        %1708 = vst.msk [vmem:[%s306 + $0x158] sm:$0xff] %vm1327, %v1644
        %1709 = vst.msk [vmem:[%s306 + $0x160] sm:$0xff] %vm1327, %v1645
        %1710 = vst.msk [vmem:[%s306 + $0x168] sm:$0xff] %vm1327, %v1646
        %1711 = vst.msk [vmem:[%s306 + $0x170] sm:$0xff] %vm1327, %v1647
        %1712 = vst.msk [vmem:[%s306 + $0x178] sm:$0xff] %vm1327, %v1648
        %1713 = vst.msk [vmem:[%s306 + $0x180] sm:$0xff] %vm1327, %v1649
        %1714 = vst.msk [vmem:[%s306 + $0x188] sm:$0xff] %vm1327, %v1650
        %1715 = vst.msk [vmem:[%s306 + $0x190] sm:$0xff] %vm1327, %v1651
        %1716 = vst.msk [vmem:[%s306 + $0x198] sm:$0xff] %vm1327, %v1652
        %1717 = vst.msk [vmem:[%s306 + $0x1a0] sm:$0xff] %vm1327, %v1653
        %1718 = vst.msk [vmem:[%s306 + $0x1a8] sm:$0xff] %vm1327, %v1654
        %1719 = vst.msk [vmem:[%s306 + $0x1b0] sm:$0xff] %vm1327, %v1655
        %1720 = vst.msk [vmem:[%s306 + $0x1b8] sm:$0xff] %vm1327, %v1656
        %1721 = vst.msk [vmem:[%s306 + $0x1c0] sm:$0xff] %vm1327, %v1657
        %1722 = vst.msk [vmem:[%s306 + $0x1c8] sm:$0xff] %vm1327, %v1658
        %1723 = vst.msk [vmem:[%s306 + $0x1d0] sm:$0xff] %vm1327, %v1659
        %1724 = vst.msk [vmem:[%s306 + $0x1d8] sm:$0xff] %vm1327, %v1660
        %1725 = vst.msk [vmem:[%s306 + $0x1e0] sm:$0xff] %vm1327, %v1661
        %1726 = vst.msk [vmem:[%s306 + $0x1e8] sm:$0xff] %vm1327, %v1662
        %1727 = vst.msk [vmem:[%s306 + $0x1f0] sm:$0xff] %vm1327, %v1663
        %1728 = vst.msk [vmem:[%s306 + $0x1f8] sm:$0xff] %vm1327, %v1664
      $region44: #{stem_conv.1} parent=35 // pred_fallthru
        _
      %s1729 = smul.u32 64, %s20
      %p1730 = scmp.lt.s32.totalorder %s1729, 1599
      %s1731 = scalar_select %p1730, %s1729, 1599
      %p1732 = scmp.lt.s32.totalorder %s21, 0
      %s1733 = scalar_select %p1732, %s21, 0
      %s1734 = sadd.s32 %s1733, %s1731
      %s1735 = smul.addr %s1734, 8
      %s1736 = scalar_lea.vmem %s4, %s1735
      // Predicated region
      $region45: #{stem_conv.1} parent=35 // pred_check
        %p1737 = pneg %p162
      $region46: #{stem_conv.1} parent=35 // pred_check_branch
        %1739 = sbr.rel (%p1737) target = $region48
      $region47: #{stem_conv.1} parent=35 // pred_region
        %s1740 = smul.u32 64, %s20
      $region48: #{stem_conv.1} parent=35 // pred_fallthru
        _
    $region36: #{stem_conv.1} parent=5 // pred_fallthru
      _
    %p1741 = scmp.le.s32.totalorder 2, %s10
    // Predicated region
    $region49: #{stem_conv.1} parent=5 // pred_check
      %p1742 = pneg %p1741
    $region50: #{stem_conv.1} parent=5 // pred_check_branch
      %1744 = sbr.rel (%p1742) target = $region52
    $region51: #{stem_conv.1} parent=5 // pred_region
      %s1745 = ssub.s32 %s10, 2
      // Predicated region
      $region53: #{stem_conv.1} parent=51 // pred_check
        %p1746 = pneg %p168
      $region54: #{stem_conv.1} parent=51 // pred_check_branch
        %1748 = sbr.rel (%p1746) target = $region56
      $region55: #{stem_conv.1} parent=51 // pred_region
        %s1749 = smul.u32 64, %s23
        %p1750 = scmp.lt.s32.totalorder %s1749, 1599
        %s1751 = scalar_select %p1750, %s1749, 1599
        %p1752 = scmp.lt.s32.totalorder %s24, 0
        %s1753 = scalar_select %p1752, %s24, 0
        %s1754 = sadd.s32 %s1753, %s1751
        %s1755 = smul.addr %s1754, 8
        %s1756 = scalar_lea.vmem %s4, %s1755
      $region56: #{stem_conv.1} parent=51 // pred_fallthru
        _
    $region52: #{stem_conv.1} parent=5 // pred_fallthru
      _
  $region6: #{stem_conv.1} parent=0 // loop_footer
    %s14 = sadd.s32 1, %s10
  $region7: #{stem_conv.1} parent=0 // loop_footer_branch
    %9 = sbr.rel target = $region3
  $region8: #{stem_conv.1} parent=0 // loop_exit
    _

</llo_original>
